<compile_context>
chip_gen: v5e
topology: v5e:2x2
jax: 0.10.0
libtpu: 0.0.40
codegen_flags: <defaults>
</compile_context>

<pallas_src>
import functools

import jax
import jax.numpy as jnp
from jax import lax
from jax.experimental import pallas as pl
from jax.experimental.pallas import tpu as pltpu

BN_EPS = 1e-5  # nn.BatchNorm2d default (the spec module uses bn=nn.BatchNorm2d)


# ----------------------------------------------------------------------------
# Helpers
# ----------------------------------------------------------------------------
def _vmem_capacity_bytes():
    try:
        return int(pltpu.get_tpu_info().vmem_capacity_bytes)
    except Exception:
        return 64 << 20  # conservative: v7x per-TensorCore VMEM


def _round_up(x, m):
    return (x + m - 1) // m * m


def _largest_divisor(n, max_val, quantum):
    """Largest divisor of n that is <= max_val and a multiple of quantum.

    Assumes quantum divides n; falls back to quantum."""
    best = quantum
    i = 1
    while i * i <= n:
        if n % i == 0:
            for c in (i, n // i):
                if c <= max_val and c % quantum == 0 and c > best:
                    best = c
        i += 1
    return best


# ----------------------------------------------------------------------------
# Pass 1: in-kernel tap-streamed conv (accumulated MXU matmuls) + BN statistics
# ----------------------------------------------------------------------------
def _conv_stats_kernel(x_ref, w_ref, y_ref, ssum_ref, ssq_ref, *,
                       th, wout_p, hout, wout, kh, kw, dil, need_mask):
    # x_ref:    (Hp_ext, Wp_ext, Cin)  padded NHWC image of one batch element,
    #                                  resident in VMEM across the row-tile axis
    # w_ref:    (kh*kw, Cin, Cout)     per-tap weight matrices
    # y_ref:    (TH*Wout_p, Cout)      un-normalized conv output tile (compute dtype)
    # ssum_ref: (1, Cout)              running per-channel sum   (resident across t)
    # ssq_ref:  (1, Cout)              running per-channel sumsq (resident across t)
    t = pl.program_id(1)
    row0 = t * th                      # first output row of this tile (stride == 1)
    cin = x_ref.shape[-1]
    cout = w_ref.shape[-1]

    acc = jnp.zeros((th * wout_p, cout), jnp.float32)
    for i in range(kh):
        for j in range(kw):
            xs = x_ref[pl.ds(row0 + i * dil, th), pl.ds(j * dil, wout_p), :]
            # Trivial relayout: Wout_p % 8 == 0 and the lane dim (Cin) is unchanged.
            xs = xs.reshape(th * wout_p, cin)
            acc += jnp.dot(xs, w_ref[i * kw + j],
                           preferred_element_type=jnp.float32)

    if need_mask:
        # Zero positions that only exist because of tile padding so they do not
        # pollute the batch-norm statistics (they are cropped in the wrapper).
        flat = lax.broadcasted_iota(jnp.int32, (th * wout_p, 1), 0)
        rows = row0 + flat // wout_p
        cols = flat % wout_p
        valid = (rows < hout) & (cols < wout)
        acc = jnp.where(valid, acc, 0.0)

    # Store the intermediate in compute dtype; stats come from the f32 accumulator.
    y_ref[...] = acc.astype(y_ref.dtype)

    psum = jnp.sum(acc, axis=0, keepdims=True)        # (1, Cout) f32
    psq = jnp.sum(acc * acc, axis=0, keepdims=True)   # (1, Cout) f32

    @pl.when(t == 0)
    def _init():
        ssum_ref[...] = psum
        ssq_ref[...] = psq

    @pl.when(t != 0)
    def _accum():
        ssum_ref[...] += psum
        ssq_ref[...] += psq


# ----------------------------------------------------------------------------
# Pass 2: folded BN affine (scale/shift) + ReLU, large element-wise tiles
# ----------------------------------------------------------------------------
def _affine_relu_kernel(y_ref, scale_ref, shift_ref, o_ref, *, need_relu):
    # y_ref: (TL2, Cout) compute dtype; scale/shift: (1, Cout) f32
    y = y_ref[...].astype(jnp.float32) * scale_ref[...] + shift_ref[...]
    if need_relu:
        y = jnp.maximum(y, 0.0)
    o_ref[...] = y.astype(o_ref.dtype)


# ----------------------------------------------------------------------------
# Wrapper
# ----------------------------------------------------------------------------
def basic_conv2d(x, weight, gamma, beta, *, stride=1, padding=0, dilation=1,
                 need_relu=True, compute_dtype=jnp.bfloat16):
    """Forward of BasicConv2d.  x: NCHW float32.  weight: (Cout, Cin, kh, kw)."""
    if stride != 1:
        # TODO(synk): stride > 1 needs a strided in-kernel tap gather
        # (pl.ds(..., stride=s)); all PAFNet BasicConv2d uses are stride == 1.
        raise NotImplementedError("Pallas BasicConv2d kernel supports stride == 1 only")

    n, cin, h, w = x.shape
    cout, cin_w, kh, kw = weight.shape
    assert cin_w == cin
    dil, p = dilation, padding

    hout = h + 2 * p - dil * (kh - 1)
    wout = w + 2 * p - dil * (kw - 1)
    assert hout > 0 and wout > 0

    esz = jnp.dtype(compute_dtype).itemsize
    vmem_cap = _vmem_capacity_bytes()

    # ---------------- tiling (generation-aware VMEM budget) -----------------
    wout_p = _round_up(wout, 8)                       # sublane-aligned tap width
    th = max(1, min(hout, -(-768 // wout_p)))         # ~768 output positions / tile

    def p1_bytes(th_):
        hp_ = _round_up(hout, th_) + dil * (kh - 1)
        wp_ = wout_p + dil * (kw - 1)
        return (2 * (hp_ * wp_ * cin * esz                    # resident image (x2 bufs)
                     + kh * kw * cin * cout * esz             # weights (x2 bufs)
                     + th_ * wout_p * cout * esz              # y tile (x2 bufs)
                     + 4 * cout * 4)                          # stats blocks
                + th_ * wout_p * cout * 4)                    # f32 accumulator

    while th > 1 and p1_bytes(th) > vmem_cap // 2:
        th = (th + 1) // 2

    hout_p = _round_up(hout, th)
    n_row_tiles = hout_p // th
    hp_ext = hout_p + dil * (kh - 1)                  # input rows needed (stride 1)
    wp_ext = wout_p + dil * (kw - 1)                  # input cols needed (stride 1)
    hwpad = hout_p * wout_p
    need_mask = (hout_p != hout) or (wout_p != wout)

    # ---------------- wrapper-side prep (cast first, then pad) --------------
    xnhwc = jnp.transpose(x.astype(compute_dtype), (0, 2, 3, 1))   # NCHW -> NHWC
    xp = jnp.pad(xnhwc, ((0, 0),
                         (p, hp_ext - h - p),
                         (p, wp_ext - w - p),
                         (0, 0)))
    w_taps = jnp.transpose(weight, (2, 3, 1, 0)).reshape(kh * kw, cin, cout)
    w_taps = w_taps.astype(compute_dtype)

    vmem_limit1 = int(min(max(p1_bytes(th) + (8 << 20), 32 << 20),
                          int(vmem_cap * 0.8)))

    flops1 = 2 * n * hwpad * cout * cin * kh * kw
    bytes1 = (n * hp_ext * wp_ext * cin * esz + kh * kw * cin * cout * esz
              + n * hwpad * cout * esz + 2 * n * cout * 4)

    kern1 = functools.partial(_conv_stats_kernel, th=th, wout_p=wout_p,
                              hout=hout, wout=wout, kh=kh, kw=kw, dil=dil,
                              need_mask=need_mask)

    y, ssum, ssq = pl.pallas_call(
        kern1,
        grid=(n, n_row_tiles),
        in_specs=(
            # Whole padded image of one batch element: block index only changes
            # with b, so it is DMA'd from HBM once per batch element and stays
            # resident across all row tiles (no im2col, no repeated reads).
            pl.BlockSpec((None, hp_ext, wp_ext, cin), lambda b, t: (b, 0, 0, 0)),
            pl.BlockSpec((kh * kw, cin, cout), lambda b, t: (0, 0, 0)),
        ),
        out_specs=(
            pl.BlockSpec((None, th * wout_p, cout), lambda b, t: (b, t, 0)),
            pl.BlockSpec((None, 1, cout), lambda b, t: (b, 0, 0)),
            pl.BlockSpec((None, 1, cout), lambda b, t: (b, 0, 0)),
        ),
        out_shape=(
            jax.ShapeDtypeStruct((n, hwpad, cout), compute_dtype),
            jax.ShapeDtypeStruct((n, 1, cout), jnp.float32),
            jax.ShapeDtypeStruct((n, 1, cout), jnp.float32),
        ),
        compiler_params=pltpu.CompilerParams(
            dimension_semantics=("parallel", "arbitrary"),
            vmem_limit_bytes=vmem_limit1,
        ),
        cost_estimate=pl.CostEstimate(flops=flops1, transcendentals=0,
                                      bytes_accessed=bytes1),
    )(xp, w_taps)

    # Fold training-mode BN (batch stats, biased variance) + affine into
    # per-channel scale/shift (tiny wrapper math, once per channel).
    count = jnp.float32(n * hout * wout)
    s = jnp.sum(ssum, axis=(0, 1))
    sq = jnp.sum(ssq, axis=(0, 1))
    mean = s / count
    # TODO(synk): E[y^2]-E[y]^2 in f32 can cancel for very large N*H*W; switch
    # to shifted/compensated partial sums if that regime matters.
    var = jnp.maximum(sq / count - mean * mean, 0.0)
    scale = (gamma.astype(jnp.float32) * lax.rsqrt(var + BN_EPS)).reshape(1, cout)
    shift = beta.astype(jnp.float32).reshape(1, cout) - mean.reshape(1, cout) * scale

    # ---------------- pass 2: large independent tiles ------------------------
    bytes_per_pos = cout * (esz + 4)
    max_tl2 = max(8, (16 << 20) // max(bytes_per_pos, 1))
    tl2 = _largest_divisor(hwpad, max_tl2, 8)
    n_tiles2 = hwpad // tl2
    vmem_limit2 = int(min(max(2 * tl2 * bytes_per_pos + (8 << 20), 32 << 20),
                          int(vmem_cap * 0.8)))

    flops2 = 3 * n * hwpad * cout
    bytes2 = n * hwpad * cout * (esz + 4) + 2 * cout * 4

    out_flat = pl.pallas_call(
        functools.partial(_affine_relu_kernel, need_relu=need_relu),
        grid=(n, n_tiles2),
        in_specs=(
            pl.BlockSpec((None, tl2, cout), lambda b, t: (b, t, 0)),
            pl.BlockSpec((1, cout), lambda b, t: (0, 0)),
            pl.BlockSpec((1, cout), lambda b, t: (0, 0)),
        ),
        out_specs=pl.BlockSpec((None, tl2, cout), lambda b, t: (b, t, 0)),
        out_shape=jax.ShapeDtypeStruct((n, hwpad, cout), jnp.float32),
        compiler_params=pltpu.CompilerParams(
            dimension_semantics=("parallel", "parallel"),
            vmem_limit_bytes=vmem_limit2,
        ),
        cost_estimate=pl.CostEstimate(flops=flops2, transcendentals=0,
                                      bytes_accessed=bytes2),
    )(y, scale, shift)

    out = out_flat.reshape(n, hout_p, wout_p, cout)[:, :hout, :wout, :]
    # TODO(synk): fuse this NHWC->NCHW transpose into pass 2 (in-kernel 2-D
    # transpose emitting (Cout, HW) lane-dense tiles) to save one XLA pass.
    return jnp.transpose(out, (0, 3, 1, 2))


# ----------------------------------------------------------------------------
# Plain-JAX reference (lax conv + train-mode BN + ReLU)
# ----------------------------------------------------------------------------
def _reference(x, weight, gamma, beta, *, stride, padding, dilation, need_relu):
    y = lax.conv_general_dilated(
        x, weight,
        window_strides=(stride, stride),
        padding=[(padding, padding), (padding, padding)],
        rhs_dilation=(dilation, dilation),
        dimension_numbers=("NCHW", "OIHW", "NCHW"),
        precision=lax.Precision.HIGHEST,
    )
    mean = jnp.mean(y, axis=(0, 2, 3), keepdims=True)
    var = jnp.mean((y - mean) ** 2, axis=(0, 2, 3), keepdims=True)
    y = (y - mean) * lax.rsqrt(var + BN_EPS)
    y = y * gamma.reshape(1, -1, 1, 1) + beta.reshape(1, -1, 1, 1)
    if need_relu:
        y = jnp.maximum(y, 0.0)
    return y


def _run_case(key, n, cin, cout, hw, kk, pad, dil, compute_dtype, tol):
    kx, kw_ = jax.random.split(key)
    x = jax.random.normal(kx, (n, cin, hw, hw), dtype=jnp.float32)
    fan_in = cin * kk * kk
    weight = jax.random.normal(kw_, (cout, cin, kk, kk), dtype=jnp.float32) / jnp.sqrt(fan_in)
    gamma = jnp.ones((cout,), dtype=jnp.float32)
    beta = jnp.zeros((cout,), dtype=jnp.float32)

    ref = _reference(x, weight, gamma, beta, stride=1, padding=pad,
                     dilation=dil, need_relu=True)
    out = basic_conv2d(x, weight, gamma, beta, stride=1, padding=pad,
                       dilation=dil, need_relu=True, compute_dtype=compute_dtype)
    out = jax.block_until_ready(out)
    assert out.shape == ref.shape, (out.shape, ref.shape)
    assert jnp.allclose(out, ref, atol=tol, rtol=tol), \
        f"max abs err {jnp.max(jnp.abs(out - ref))}"


if __name__ == "__main__":
    key = jax.random.PRNGKey(0)
    k1, k2, k3 = jax.random.split(key, 3)

    # BasicConv2d(4, 8, 3, padding=1): f32 compute path (strict-ish) and the
    # default bf16 (MXU-native) compute path.
    _run_case(k1, n=2, cin=4, cout=8, hw=16, kk=3, pad=1, dil=1,
              compute_dtype=jnp.float32, tol=1e-2)
    _run_case(k2, n=2, cin=4, cout=8, hw=16, kk=3, pad=1, dil=1,
              compute_dtype=jnp.bfloat16, tol=5e-2)

    # Odd spatial size + dilation: exercises the sublane-padded (masked) path.
    _run_case(k3, n=2, cin=4, cout=8, hw=15, kk=3, pad=2, dil=2,
              compute_dtype=jnp.float32, tol=1e-2)

    print("KERNEL_OK")
</pallas_src>

<mosaic_0001>
module attributes {stable_mosaic.version = 11 : i64} {
  func.func @_conv_stats_kernel(%arg0: i32, %arg1: i32, %arg2: memref<1x18x18x4xf32, #tpu.memory_space<vmem>>, %arg3: memref<9x4x8xf32, #tpu.memory_space<vmem>>, %arg4: memref<1x256x8xf32, #tpu.memory_space<vmem>>, %arg5: memref<1x1x8xf32, #tpu.memory_space<vmem>>, %arg6: memref<1x1x8xf32, #tpu.memory_space<vmem>>) attributes {dimension_semantics = [#tpu.dimension_semantics<parallel>, #tpu.dimension_semantics<arbitrary>], iteration_bounds = array<i64: 2, 1>, scalar_prefetch = 0 : i64, scratch_operands = 0 : i64, tpu.core_type = #tpu.core_type<tc>, window_params = [{transform_indices = @transform_0, window_bounds = array<i64: 1, 18, 18, 4>}, {pipeline_mode = #tpu.pipeline_mode<synchronous>, transform_indices = @transform_1, window_bounds = array<i64: 9, 4, 8>}, {transform_indices = @transform_2, window_bounds = array<i64: 1, 256, 8>}, {transform_indices = @transform_3, window_bounds = array<i64: 1, 1, 8>}, {transform_indices = @transform_4, window_bounds = array<i64: 1, 1, 8>}]} {
    %c16_i32 = arith.constant 16 : i32
    %0 = arith.muli %arg1, %c16_i32 : i32
    %cst = arith.constant 0.000000e+00 : f32
    %1 = vector.broadcast %cst : f32 to vector<256x8xf32>
    %c0_i32 = arith.constant 0 : i32
    %2 = arith.addi %0, %c0_i32 : i32
    %c0 = arith.constant 0 : index
    %3 = arith.index_cast %2 : i32 to index
    %c0_0 = arith.constant 0 : index
    %c0_1 = arith.constant 0 : index
    %4 = vector.load %arg2[%c0, %3, %c0_0, %c0_1] : memref<1x18x18x4xf32, #tpu.memory_space<vmem>>, vector<1x16x16x4xf32>
    %5 = vector.shape_cast %4 : vector<1x16x16x4xf32> to vector<16x16x4xf32>
    %6 = vector.shape_cast %5 : vector<16x16x4xf32> to vector<256x4xf32>
    %c0_2 = arith.constant 0 : index
    %c0_3 = arith.constant 0 : index
    %c0_4 = arith.constant 0 : index
    %7 = vector.load %arg3[%c0_2, %c0_3, %c0_4] : memref<9x4x8xf32, #tpu.memory_space<vmem>>, vector<1x4x8xf32>
    %8 = vector.shape_cast %7 : vector<1x4x8xf32> to vector<4x8xf32>
    %cst_5 = arith.constant dense<0.000000e+00> : vector<256x8xf32>
    %9 = tpu.matmul %6, %8, %cst_5 {dimension_numbers = #tpu.dot_dimension_numbers<[1], [0], [0], [1], [0, 0, 1, 1], [], []>} : vector<256x4xf32>, vector<4x8xf32>, vector<256x8xf32> -> vector<256x8xf32>
    %10 = arith.addf %1, %9 : vector<256x8xf32>
    %c0_i32_6 = arith.constant 0 : i32
    %11 = arith.addi %0, %c0_i32_6 : i32
    %c0_7 = arith.constant 0 : index
    %12 = arith.index_cast %11 : i32 to index
    %c1 = arith.constant 1 : index
    %c0_8 = arith.constant 0 : index
    %13 = vector.load %arg2[%c0_7, %12, %c1, %c0_8] : memref<1x18x18x4xf32, #tpu.memory_space<vmem>>, vector<1x16x16x4xf32>
    %14 = vector.shape_cast %13 : vector<1x16x16x4xf32> to vector<16x16x4xf32>
    %15 = vector.shape_cast %14 : vector<16x16x4xf32> to vector<256x4xf32>
    %c1_9 = arith.constant 1 : index
    %c0_10 = arith.constant 0 : index
    %c0_11 = arith.constant 0 : index
    %16 = vector.load %arg3[%c1_9, %c0_10, %c0_11] : memref<9x4x8xf32, #tpu.memory_space<vmem>>, vector<1x4x8xf32>
    %17 = vector.shape_cast %16 : vector<1x4x8xf32> to vector<4x8xf32>
    %cst_12 = arith.constant dense<0.000000e+00> : vector<256x8xf32>
    %18 = tpu.matmul %15, %17, %cst_12 {dimension_numbers = #tpu.dot_dimension_numbers<[1], [0], [0], [1], [0, 0, 1, 1], [], []>} : vector<256x4xf32>, vector<4x8xf32>, vector<256x8xf32> -> vector<256x8xf32>
    %19 = arith.addf %10, %18 : vector<256x8xf32>
    %c0_i32_13 = arith.constant 0 : i32
    %20 = arith.addi %0, %c0_i32_13 : i32
    %c0_14 = arith.constant 0 : index
    %21 = arith.index_cast %20 : i32 to index
    %c2 = arith.constant 2 : index
    %c0_15 = arith.constant 0 : index
    %22 = vector.load %arg2[%c0_14, %21, %c2, %c0_15] : memref<1x18x18x4xf32, #tpu.memory_space<vmem>>, vector<1x16x16x4xf32>
    %23 = vector.shape_cast %22 : vector<1x16x16x4xf32> to vector<16x16x4xf32>
    %24 = vector.shape_cast %23 : vector<16x16x4xf32> to vector<256x4xf32>
    %c2_16 = arith.constant 2 : index
    %c0_17 = arith.constant 0 : index
    %c0_18 = arith.constant 0 : index
    %25 = vector.load %arg3[%c2_16, %c0_17, %c0_18] : memref<9x4x8xf32, #tpu.memory_space<vmem>>, vector<1x4x8xf32>
    %26 = vector.shape_cast %25 : vector<1x4x8xf32> to vector<4x8xf32>
    %cst_19 = arith.constant dense<0.000000e+00> : vector<256x8xf32>
    %27 = tpu.matmul %24, %26, %cst_19 {dimension_numbers = #tpu.dot_dimension_numbers<[1], [0], [0], [1], [0, 0, 1, 1], [], []>} : vector<256x4xf32>, vector<4x8xf32>, vector<256x8xf32> -> vector<256x8xf32>
    %28 = arith.addf %19, %27 : vector<256x8xf32>
    %c1_i32 = arith.constant 1 : i32
    %29 = arith.addi %0, %c1_i32 : i32
    %c0_20 = arith.constant 0 : index
    %30 = arith.index_cast %29 : i32 to index
    %c0_21 = arith.constant 0 : index
    %c0_22 = arith.constant 0 : index
    %31 = vector.load %arg2[%c0_20, %30, %c0_21, %c0_22] : memref<1x18x18x4xf32, #tpu.memory_space<vmem>>, vector<1x16x16x4xf32>
    %32 = vector.shape_cast %31 : vector<1x16x16x4xf32> to vector<16x16x4xf32>
    %33 = vector.shape_cast %32 : vector<16x16x4xf32> to vector<256x4xf32>
    %c3 = arith.constant 3 : index
    %c0_23 = arith.constant 0 : index
    %c0_24 = arith.constant 0 : index
    %34 = vector.load %arg3[%c3, %c0_23, %c0_24] : memref<9x4x8xf32, #tpu.memory_space<vmem>>, vector<1x4x8xf32>
    %35 = vector.shape_cast %34 : vector<1x4x8xf32> to vector<4x8xf32>
    %cst_25 = arith.constant dense<0.000000e+00> : vector<256x8xf32>
    %36 = tpu.matmul %33, %35, %cst_25 {dimension_numbers = #tpu.dot_dimension_numbers<[1], [0], [0], [1], [0, 0, 1, 1], [], []>} : vector<256x4xf32>, vector<4x8xf32>, vector<256x8xf32> -> vector<256x8xf32>
    %37 = arith.addf %28, %36 : vector<256x8xf32>
    %c1_i32_26 = arith.constant 1 : i32
    %38 = arith.addi %0, %c1_i32_26 : i32
    %c0_27 = arith.constant 0 : index
    %39 = arith.index_cast %38 : i32 to index
    %c1_28 = arith.constant 1 : index
    %c0_29 = arith.constant 0 : index
    %40 = vector.load %arg2[%c0_27, %39, %c1_28, %c0_29] : memref<1x18x18x4xf32, #tpu.memory_space<vmem>>, vector<1x16x16x4xf32>
    %41 = vector.shape_cast %40 : vector<1x16x16x4xf32> to vector<16x16x4xf32>
    %42 = vector.shape_cast %41 : vector<16x16x4xf32> to vector<256x4xf32>
    %c4 = arith.constant 4 : index
    %c0_30 = arith.constant 0 : index
    %c0_31 = arith.constant 0 : index
    %43 = vector.load %arg3[%c4, %c0_30, %c0_31] : memref<9x4x8xf32, #tpu.memory_space<vmem>>, vector<1x4x8xf32>
    %44 = vector.shape_cast %43 : vector<1x4x8xf32> to vector<4x8xf32>
    %cst_32 = arith.constant dense<0.000000e+00> : vector<256x8xf32>
    %45 = tpu.matmul %42, %44, %cst_32 {dimension_numbers = #tpu.dot_dimension_numbers<[1], [0], [0], [1], [0, 0, 1, 1], [], []>} : vector<256x4xf32>, vector<4x8xf32>, vector<256x8xf32> -> vector<256x8xf32>
    %46 = arith.addf %37, %45 : vector<256x8xf32>
    %c1_i32_33 = arith.constant 1 : i32
    %47 = arith.addi %0, %c1_i32_33 : i32
    %c0_34 = arith.constant 0 : index
    %48 = arith.index_cast %47 : i32 to index
    %c2_35 = arith.constant 2 : index
    %c0_36 = arith.constant 0 : index
    %49 = vector.load %arg2[%c0_34, %48, %c2_35, %c0_36] : memref<1x18x18x4xf32, #tpu.memory_space<vmem>>, vector<1x16x16x4xf32>
    %50 = vector.shape_cast %49 : vector<1x16x16x4xf32> to vector<16x16x4xf32>
    %51 = vector.shape_cast %50 : vector<16x16x4xf32> to vector<256x4xf32>
    %c5 = arith.constant 5 : index
    %c0_37 = arith.constant 0 : index
    %c0_38 = arith.constant 0 : index
    %52 = vector.load %arg3[%c5, %c0_37, %c0_38] : memref<9x4x8xf32, #tpu.memory_space<vmem>>, vector<1x4x8xf32>
    %53 = vector.shape_cast %52 : vector<1x4x8xf32> to vector<4x8xf32>
    %cst_39 = arith.constant dense<0.000000e+00> : vector<256x8xf32>
    %54 = tpu.matmul %51, %53, %cst_39 {dimension_numbers = #tpu.dot_dimension_numbers<[1], [0], [0], [1], [0, 0, 1, 1], [], []>} : vector<256x4xf32>, vector<4x8xf32>, vector<256x8xf32> -> vector<256x8xf32>
    %55 = arith.addf %46, %54 : vector<256x8xf32>
    %c2_i32 = arith.constant 2 : i32
    %56 = arith.addi %0, %c2_i32 : i32
    %c0_40 = arith.constant 0 : index
    %57 = arith.index_cast %56 : i32 to index
    %c0_41 = arith.constant 0 : index
    %c0_42 = arith.constant 0 : index
    %58 = vector.load %arg2[%c0_40, %57, %c0_41, %c0_42] : memref<1x18x18x4xf32, #tpu.memory_space<vmem>>, vector<1x16x16x4xf32>
    %59 = vector.shape_cast %58 : vector<1x16x16x4xf32> to vector<16x16x4xf32>
    %60 = vector.shape_cast %59 : vector<16x16x4xf32> to vector<256x4xf32>
    %c6 = arith.constant 6 : index
    %c0_43 = arith.constant 0 : index
    %c0_44 = arith.constant 0 : index
    %61 = vector.load %arg3[%c6, %c0_43, %c0_44] : memref<9x4x8xf32, #tpu.memory_space<vmem>>, vector<1x4x8xf32>
    %62 = vector.shape_cast %61 : vector<1x4x8xf32> to vector<4x8xf32>
    %cst_45 = arith.constant dense<0.000000e+00> : vector<256x8xf32>
    %63 = tpu.matmul %60, %62, %cst_45 {dimension_numbers = #tpu.dot_dimension_numbers<[1], [0], [0], [1], [0, 0, 1, 1], [], []>} : vector<256x4xf32>, vector<4x8xf32>, vector<256x8xf32> -> vector<256x8xf32>
    %64 = arith.addf %55, %63 : vector<256x8xf32>
    %c2_i32_46 = arith.constant 2 : i32
    %65 = arith.addi %0, %c2_i32_46 : i32
    %c0_47 = arith.constant 0 : index
    %66 = arith.index_cast %65 : i32 to index
    %c1_48 = arith.constant 1 : index
    %c0_49 = arith.constant 0 : index
    %67 = vector.load %arg2[%c0_47, %66, %c1_48, %c0_49] : memref<1x18x18x4xf32, #tpu.memory_space<vmem>>, vector<1x16x16x4xf32>
    %68 = vector.shape_cast %67 : vector<1x16x16x4xf32> to vector<16x16x4xf32>
    %69 = vector.shape_cast %68 : vector<16x16x4xf32> to vector<256x4xf32>
    %c7 = arith.constant 7 : index
    %c0_50 = arith.constant 0 : index
    %c0_51 = arith.constant 0 : index
    %70 = vector.load %arg3[%c7, %c0_50, %c0_51] : memref<9x4x8xf32, #tpu.memory_space<vmem>>, vector<1x4x8xf32>
    %71 = vector.shape_cast %70 : vector<1x4x8xf32> to vector<4x8xf32>
    %cst_52 = arith.constant dense<0.000000e+00> : vector<256x8xf32>
    %72 = tpu.matmul %69, %71, %cst_52 {dimension_numbers = #tpu.dot_dimension_numbers<[1], [0], [0], [1], [0, 0, 1, 1], [], []>} : vector<256x4xf32>, vector<4x8xf32>, vector<256x8xf32> -> vector<256x8xf32>
    %73 = arith.addf %64, %72 : vector<256x8xf32>
    %c2_i32_53 = arith.constant 2 : i32
    %74 = arith.addi %0, %c2_i32_53 : i32
    %c0_54 = arith.constant 0 : index
    %75 = arith.index_cast %74 : i32 to index
    %c2_55 = arith.constant 2 : index
    %c0_56 = arith.constant 0 : index
    %76 = vector.load %arg2[%c0_54, %75, %c2_55, %c0_56] : memref<1x18x18x4xf32, #tpu.memory_space<vmem>>, vector<1x16x16x4xf32>
    %77 = vector.shape_cast %76 : vector<1x16x16x4xf32> to vector<16x16x4xf32>
    %78 = vector.shape_cast %77 : vector<16x16x4xf32> to vector<256x4xf32>
    %c8 = arith.constant 8 : index
    %c0_57 = arith.constant 0 : index
    %c0_58 = arith.constant 0 : index
    %79 = vector.load %arg3[%c8, %c0_57, %c0_58] : memref<9x4x8xf32, #tpu.memory_space<vmem>>, vector<1x4x8xf32>
    %80 = vector.shape_cast %79 : vector<1x4x8xf32> to vector<4x8xf32>
    %cst_59 = arith.constant dense<0.000000e+00> : vector<256x8xf32>
    %81 = tpu.matmul %78, %80, %cst_59 {dimension_numbers = #tpu.dot_dimension_numbers<[1], [0], [0], [1], [0, 0, 1, 1], [], []>} : vector<256x4xf32>, vector<4x8xf32>, vector<256x8xf32> -> vector<256x8xf32>
    %82 = arith.addf %73, %81 : vector<256x8xf32>
    %c0_60 = arith.constant 0 : index
    %c0_61 = arith.constant 0 : index
    %c0_62 = arith.constant 0 : index
    %83 = vector.load %arg4[%c0_60, %c0_61, %c0_62] : memref<1x256x8xf32, #tpu.memory_space<vmem>>, vector<1x256x8xf32>
    %84 = vector.shape_cast %83 : vector<1x256x8xf32> to vector<256x8xf32>
    %85 = vector.shape_cast %82 : vector<256x8xf32> to vector<1x256x8xf32>
    tpu.vector_store %arg4[%c0_60, %c0_61, %c0_62], %85 {strides = array<i32>} : memref<1x256x8xf32, #tpu.memory_space<vmem>>, vector<1x256x8xf32>,
    %cst_63 = arith.constant dense<0.000000e+00> : vector<8xf32>
    %86 = vector.multi_reduction <add>, %82, %cst_63 [0] : vector<256x8xf32> to vector<8xf32>
    %87 = vector.shape_cast %86 : vector<8xf32> to vector<1x8xf32>
    %88 = arith.mulf %82, %82 : vector<256x8xf32>
    %cst_64 = arith.constant dense<0.000000e+00> : vector<8xf32>
    %89 = vector.multi_reduction <add>, %88, %cst_64 [0] : vector<256x8xf32> to vector<8xf32>
    %90 = vector.shape_cast %89 : vector<8xf32> to vector<1x8xf32>
    %c0_i32_65 = arith.constant 0 : i32
    %91 = arith.cmpi eq, %arg1, %c0_i32_65 : i32
    %92 = arith.extui %91 : i1 to i32
    %c0_i32_66 = arith.constant 0 : i32
    %93 = arith.cmpi ne, %92, %c0_i32_66 : i32
    scf.if %93 {
      %c0_69 = arith.constant 0 : index
      %c0_70 = arith.constant 0 : index
      %c0_71 = arith.constant 0 : index
      %97 = vector.load %arg5[%c0_69, %c0_70, %c0_71] : memref<1x1x8xf32, #tpu.memory_space<vmem>>, vector<1x1x8xf32>
      %98 = vector.shape_cast %97 : vector<1x1x8xf32> to vector<1x8xf32>
      %99 = vector.shape_cast %87 : vector<1x8xf32> to vector<1x1x8xf32>
      tpu.vector_store %arg5[%c0_69, %c0_70, %c0_71], %99 {strides = array<i32>} : memref<1x1x8xf32, #tpu.memory_space<vmem>>, vector<1x1x8xf32>,
      %c0_72 = arith.constant 0 : index
      %c0_73 = arith.constant 0 : index
      %c0_74 = arith.constant 0 : index
      %100 = vector.load %arg6[%c0_72, %c0_73, %c0_74] : memref<1x1x8xf32, #tpu.memory_space<vmem>>, vector<1x1x8xf32>
      %101 = vector.shape_cast %100 : vector<1x1x8xf32> to vector<1x8xf32>
      %102 = vector.shape_cast %90 : vector<1x8xf32> to vector<1x1x8xf32>
      tpu.vector_store %arg6[%c0_72, %c0_73, %c0_74], %102 {strides = array<i32>} : memref<1x1x8xf32, #tpu.memory_space<vmem>>, vector<1x1x8xf32>,
    } else {
    }
    %c0_i32_67 = arith.constant 0 : i32
    %94 = arith.cmpi ne, %arg1, %c0_i32_67 : i32
    %95 = arith.extui %94 : i1 to i32
    %c0_i32_68 = arith.constant 0 : i32
    %96 = arith.cmpi ne, %95, %c0_i32_68 : i32
    scf.if %96 {
      %c0_69 = arith.constant 0 : index
      %c0_70 = arith.constant 0 : index
      %c0_71 = arith.constant 0 : index
      %97 = vector.load %arg5[%c0_69, %c0_70, %c0_71] : memref<1x1x8xf32, #tpu.memory_space<vmem>>, vector<1x1x8xf32>
      %98 = vector.shape_cast %97 : vector<1x1x8xf32> to vector<1x8xf32>
      %99 = arith.addf %98, %87 : vector<1x8xf32>
      %c0_72 = arith.constant 0 : index
      %c0_73 = arith.constant 0 : index
      %c0_74 = arith.constant 0 : index
      %100 = vector.load %arg5[%c0_72, %c0_73, %c0_74] : memref<1x1x8xf32, #tpu.memory_space<vmem>>, vector<1x1x8xf32>
      %101 = vector.shape_cast %100 : vector<1x1x8xf32> to vector<1x8xf32>
      %102 = vector.shape_cast %99 : vector<1x8xf32> to vector<1x1x8xf32>
      tpu.vector_store %arg5[%c0_72, %c0_73, %c0_74], %102 {strides = array<i32>} : memref<1x1x8xf32, #tpu.memory_space<vmem>>, vector<1x1x8xf32>,
      %c0_75 = arith.constant 0 : index
      %c0_76 = arith.constant 0 : index
      %c0_77 = arith.constant 0 : index
      %103 = vector.load %arg6[%c0_75, %c0_76, %c0_77] : memref<1x1x8xf32, #tpu.memory_space<vmem>>, vector<1x1x8xf32>
      %104 = vector.shape_cast %103 : vector<1x1x8xf32> to vector<1x8xf32>
      %105 = arith.addf %104, %90 : vector<1x8xf32>
      %c0_78 = arith.constant 0 : index
      %c0_79 = arith.constant 0 : index
      %c0_80 = arith.constant 0 : index
      %106 = vector.load %arg6[%c0_78, %c0_79, %c0_80] : memref<1x1x8xf32, #tpu.memory_space<vmem>>, vector<1x1x8xf32>
      %107 = vector.shape_cast %106 : vector<1x1x8xf32> to vector<1x8xf32>
      %108 = vector.shape_cast %105 : vector<1x8xf32> to vector<1x1x8xf32>
      tpu.vector_store %arg6[%c0_78, %c0_79, %c0_80], %108 {strides = array<i32>} : memref<1x1x8xf32, #tpu.memory_space<vmem>>, vector<1x1x8xf32>,
    } else {
    }
    return
  }
  func.func @transform_0(%arg0: i32, %arg1: i32) -> (i32, i32, i32, i32) {
    %c0_i32 = arith.constant 0 : i32
    %c0_i32_0 = arith.constant 0 : i32
    %c0_i32_1 = arith.constant 0 : i32
    %c0_i32_2 = arith.constant 0 : i32
    return %arg0, %c0_i32, %c0_i32_0, %c0_i32_1 : i32, i32, i32, i32
  }
  func.func @transform_1(%arg0: i32, %arg1: i32) -> (i32, i32, i32) {
    %c0_i32 = arith.constant 0 : i32
    %c0_i32_0 = arith.constant 0 : i32
    %c0_i32_1 = arith.constant 0 : i32
    %c0_i32_2 = arith.constant 0 : i32
    return %c0_i32, %c0_i32_0, %c0_i32_1 : i32, i32, i32
  }
  func.func @transform_2(%arg0: i32, %arg1: i32) -> (i32, i32, i32) {
    %c0_i32 = arith.constant 0 : i32
    %c0_i32_0 = arith.constant 0 : i32
    return %arg0, %arg1, %c0_i32 : i32, i32, i32
  }
  func.func @transform_3(%arg0: i32, %arg1: i32) -> (i32, i32, i32) {
    %c0_i32 = arith.constant 0 : i32
    %c0_i32_0 = arith.constant 0 : i32
    %c0_i32_1 = arith.constant 0 : i32
    return %arg0, %c0_i32, %c0_i32_0 : i32, i32, i32
  }
  func.func @transform_4(%arg0: i32, %arg1: i32) -> (i32, i32, i32) {
    %c0_i32 = arith.constant 0 : i32
    %c0_i32_0 = arith.constant 0 : i32
    %c0_i32_1 = arith.constant 0 : i32
    return %arg0, %c0_i32, %c0_i32_0 : i32, i32, i32
  }
}

</mosaic_0001>

<llo_original>
// kernel: tpu_custom_call.1
$region0: #{tpu_custom_call.1}
  #allocation0 [shape = 'u32[]', space=smem, size = 0x4, offset = 0x4, fixed_abs, tag = 'smem constant byte address 0x4 - core index']
  #allocation1 [shape = 'u32[72,128]{1,0:T(1,128)}', space=vmem, size = 0x9000, scoped, tag = 'internal scratch']
  %s0 = inlined_call_operand.vmem [shape: f32[2,18,18,4], index: 0, kind: input, shape index: {}]
  %s1 = inlined_call_operand.vmem [shape: f32[9,4,8], index: 1, kind: input, shape index: {}]
  %s2 = inlined_call_operand.vmem [shape: f32[2,256,8], index: 2, kind: output, shape index: {0}]
  %s3 = inlined_call_operand.hbm [shape: f32[2,1,8], index: 3, kind: output, shape index: {1}]
  %s4 = inlined_call_operand.hbm [shape: f32[2,1,8], index: 4, kind: output, shape index: {2}]
  %5 = xla_tuple %s2, %s3, %s4
  %s6 = sld [smem:[#allocation0]]
  $region65: #{tpu_custom_call.1} parent=0
    _
  %s8 = ssub.s32 1, %s6
  %s9 = scalar_select 0, %s8, %s6
  $region1: #{tpu_custom_call.1} parent=0
    #allocation2 [shape = 'u8[1024]{0}', space=vmem, size = 0x400, scoped, tag = 'output window, operand 1']
    #allocation3 [shape = 's32[2]{0}', space=sflag, size = 0x8, scoped, tag = 'scoped memory for tpu_custom_call.1']
    #allocation4 [shape = 'u8[1024]{0}', space=vmem, size = 0x400, scoped, tag = 'output window, operand 2']
    #allocation5 [shape = 's32[2]{0}', space=sflag, size = 0x8, scoped, tag = 'scoped memory for tpu_custom_call.1']
    %10 = vsyncpa [#allocation3], 0
    %s11 = scalar_lea.sflag [#allocation3], 1
    %12 = vsyncpa %s11, 0
    %13 = vsyncpa [#allocation5], 0
    %s14 = scalar_lea.sflag [#allocation5], 1
    %15 = vsyncpa %s14, 0
    loop: start=0, step=1, limit=4
    $region2: #{tpu_custom_call.1} parent=1 // loop_pre_header
      _
    $region3: #{tpu_custom_call.1} parent=1 // loop_header
      %s17 = sphi 0, %s21
      %p18 = scmp.ge.s32.totalorder %s17, 4
      %s24 = sphi 0, %s36
      %s25 = sphi 0, %s32
      %s26 = sphi 0, %s24
      %s27 = sphi 0, %s25
      %s28 = sphi 0, %s26
      %s29 = sphi 0, %s27
      %s39 = sphi 0, %s41
      %s42 = sphi 0, %s39
      %s43 = sphi 0, %s42
      %s59 = sphi 0, %s43
      %s63 = sphi 0, %s63
      %s65 = sphi 0, %s63
      %s66 = sphi 0, %s65
      %s80 = sphi 0, %s66
      %s88 = sphi 0, %s90
      %s91 = sphi 0, %s88
      %s92 = sphi 0, %s91
      %s108 = sphi 0, %s92
      %s114 = sphi 0, %s116
      %s117 = sphi 0, %s114
      %s118 = sphi 0, %s117
      %s134 = sphi 0, %s118
      %s140 = sphi 0, %s142
      %s143 = sphi 0, %s140
      %s144 = sphi 0, %s143
      %s160 = sphi 0, %s144
    $region4: #{tpu_custom_call.1} parent=1 // loop_header_branch
      %20 = sbr.rel (%p18) target = $region8
    $region5: #{tpu_custom_call.1} parent=1 // loop_body
      %s22 = ssub.s32 %s17, 1
      %s23 = ssub.s32 %s17, 2
      %s30 = sadd.s32 1, %s25
      %p31 = scmp.ge.s32.totalorder %s30, 1
      %s32 = scalar_select %p31, 0, %s30
      %s33 = sadd.s32 1, %s24
      %s34 = scalar_select %p31, %s33, %s24
      %p35 = scmp.ge.s32.totalorder %s34, 2
      %s36 = scalar_select %p35, 0, %s34
      %s37 = ssub.s32 %s24, %s36
      %p38 = scmp.eq.s32.totalorder %s37, 0
      %s40 = sadd.s32 %s39, 1
      %s41 = scalar_select %p38, %s39, %s40
      %p44 = pneg %p38
      %p45 = scmp.eq.s32.totalorder %s17, 1
      %p46 = por %p44, %p45
      %p47 = scmp.ne.s32.totalorder %s39, %s42
      %p48 = scmp.eq.s32.totalorder %s17, 0
      %p49 = por %p47, %p48
      %p50 = scmp.ne.s32.totalorder %s39, %s42
      %p51 = scmp.eq.s32.totalorder %s22, 1
      %p52 = por %p50, %p51
      %p53 = scmp.ne.s32.totalorder %s42, %s43
      %p54 = scmp.eq.s32.totalorder %s22, 0
      %p55 = por %p53, %p54
      %p56 = scmp.ne.s32.totalorder %s42, %s43
      %p57 = scmp.eq.s32.totalorder %s23, 1
      %p58 = por %p56, %p57
      %p60 = scmp.ne.s32.totalorder %s43, %s59
      %p61 = scmp.eq.s32.totalorder %s23, 0
      %p62 = por %p60, %p61
      %s64 = sadd.s32 %s63, 1
      %p67 = scmp.eq.s32.totalorder %s17, 1
      %p68 = scmp.ne.s32.totalorder %s63, %s65
      %p69 = scmp.eq.s32.totalorder %s17, 0
      %p70 = por %p68, %p69
      %p71 = scmp.ne.s32.totalorder %s63, %s65
      %p72 = scmp.eq.s32.totalorder %s22, 1
      %p73 = por %p71, %p72
      %p74 = scmp.ne.s32.totalorder %s65, %s66
      %p75 = scmp.eq.s32.totalorder %s22, 0
      %p76 = por %p74, %p75
      %p77 = scmp.ne.s32.totalorder %s65, %s66
      %p78 = scmp.eq.s32.totalorder %s23, 1
      %p79 = por %p77, %p78
      %p81 = scmp.ne.s32.totalorder %s66, %s80
      %p82 = scmp.eq.s32.totalorder %s23, 0
      %p83 = por %p81, %p82
      %s84 = ssub.s32 %s24, %s36
      %s85 = ssub.s32 %s25, %s32
      %s86 = sor.u32 %s84, %s85
      %p87 = scmp.eq.s32.totalorder %s86, 0
      %s89 = sadd.s32 %s88, 1
      %s90 = scalar_select %p87, %s88, %s89
      %p93 = pneg %p87
      %p94 = scmp.eq.s32.totalorder %s17, 1
      %p95 = por %p93, %p94
      %p96 = scmp.ne.s32.totalorder %s88, %s91
      %p97 = scmp.eq.s32.totalorder %s17, 0
      %p98 = por %p96, %p97
      %p99 = scmp.ne.s32.totalorder %s88, %s91
      %p100 = scmp.eq.s32.totalorder %s22, 1
      %p101 = por %p99, %p100
      %p102 = scmp.ne.s32.totalorder %s91, %s92
      %p103 = scmp.eq.s32.totalorder %s22, 0
      %p104 = por %p102, %p103
      %p105 = scmp.ne.s32.totalorder %s91, %s92
      %p106 = scmp.eq.s32.totalorder %s23, 1
      %p107 = por %p105, %p106
      %p109 = scmp.ne.s32.totalorder %s92, %s108
      %p110 = scmp.eq.s32.totalorder %s23, 0
      %p111 = por %p109, %p110
      %s112 = ssub.s32 %s24, %s36
      %p113 = scmp.eq.s32.totalorder %s112, 0
      %s115 = sadd.s32 %s114, 1
      %s116 = scalar_select %p113, %s114, %s115
      %p119 = pneg %p113
      %p120 = scmp.eq.s32.totalorder %s17, 1
      %p121 = por %p119, %p120
      %p122 = scmp.ne.s32.totalorder %s114, %s117
      %p123 = scmp.eq.s32.totalorder %s17, 0
      %p124 = por %p122, %p123
      %p125 = scmp.ne.s32.totalorder %s114, %s117
      %p126 = scmp.eq.s32.totalorder %s22, 1
      %p127 = por %p125, %p126
      %p128 = scmp.ne.s32.totalorder %s117, %s118
      %p129 = scmp.eq.s32.totalorder %s22, 0
      %p130 = por %p128, %p129
      %p131 = scmp.ne.s32.totalorder %s117, %s118
      %p132 = scmp.eq.s32.totalorder %s23, 1
      %p133 = por %p131, %p132
      %p135 = scmp.ne.s32.totalorder %s118, %s134
      %p136 = scmp.eq.s32.totalorder %s23, 0
      %p137 = por %p135, %p136
      %s138 = ssub.s32 %s24, %s36
      %p139 = scmp.eq.s32.totalorder %s138, 0
      %s141 = sadd.s32 %s140, 1
      %s142 = scalar_select %p139, %s140, %s141
      %p145 = pneg %p139
      %p146 = scmp.eq.s32.totalorder %s17, 1
      %p147 = por %p145, %p146
      %p148 = scmp.ne.s32.totalorder %s140, %s143
      %p149 = scmp.eq.s32.totalorder %s17, 0
      %p150 = por %p148, %p149
      %p151 = scmp.ne.s32.totalorder %s140, %s143
      %p152 = scmp.eq.s32.totalorder %s22, 1
      %p153 = por %p151, %p152
      %p154 = scmp.ne.s32.totalorder %s143, %s144
      %p155 = scmp.eq.s32.totalorder %s22, 0
      %p156 = por %p154, %p155
      %p157 = scmp.ne.s32.totalorder %s143, %s144
      %p158 = scmp.eq.s32.totalorder %s23, 1
      %p159 = por %p157, %p158
      %p161 = scmp.ne.s32.totalorder %s144, %s160
      %p162 = scmp.eq.s32.totalorder %s23, 0
      %p163 = por %p161, %p162
      %p164 = scmp.le.s32.totalorder 1, %s17
      %p165 = scmp.lt.s32.totalorder %s17, 3
      %p166 = pnand %p164, %p165
      %p167 = pneg %p166
      // Predicated region
      $region9: #{tpu_custom_call.1} parent=5 // pred_check
        _
      $region10: #{tpu_custom_call.1} parent=5 // pred_check_branch
        %169 = sbr.rel (%p166) target = $region12
      $region11: #{tpu_custom_call.1} parent=5 // pred_region
        %s170 = ssub.s32 %s17, 1
        // Predicated region
        $region13: #{tpu_custom_call.1} parent=11 // pred_check
          %p171 = pneg %p76
        $region14: #{tpu_custom_call.1} parent=11 // pred_check_branch
          %173 = sbr.rel (%p171) target = $region16
        $region15: #{tpu_custom_call.1} parent=11 // pred_region
          _
        $region16: #{tpu_custom_call.1} parent=11 // pred_fallthru
          _
      $region12: #{tpu_custom_call.1} parent=5 // pred_fallthru
        _
      %p174 = scmp.lt.s32.totalorder %s17, 2
      // Predicated region
      $region17: #{tpu_custom_call.1} parent=5 // pred_check
        %p175 = pneg %p174
      $region18: #{tpu_custom_call.1} parent=5 // pred_check_branch
        %177 = sbr.rel (%p175) target = $region20
      $region19: #{tpu_custom_call.1} parent=5 // pred_region
        // Predicated region
        $region21: #{tpu_custom_call.1} parent=19 // pred_check
          %p178 = pneg %p49
        $region22: #{tpu_custom_call.1} parent=19 // pred_check_branch
          %180 = sbr.rel (%p178) target = $region24
        $region23: #{tpu_custom_call.1} parent=19 // pred_region
          %p181 = scmp.lt.s32.totalorder %s24, 1
          %s182 = scalar_select %p181, %s24, 1
          %s183 = smul.addr %s182, 54
          %s184 = smul.addr %s183, 8
          %s185 = scalar_lea.vmem %s0, %s184
        $region24: #{tpu_custom_call.1} parent=19 // pred_fallthru
          _
      $region20: #{tpu_custom_call.1} parent=5 // pred_fallthru
        _
      %p186 = scmp.le.s32.totalorder 1, %s17
      %p187 = scmp.lt.s32.totalorder %s17, 3
      %p188 = pnand %p186, %p187
      %p189 = pneg %p188
      // Predicated region
      $region25: #{tpu_custom_call.1} parent=5 // pred_check
        _
      $region26: #{tpu_custom_call.1} parent=5 // pred_check_branch
        %191 = sbr.rel (%p188) target = $region28
      $region27: #{tpu_custom_call.1} parent=5 // pred_region
        %s192 = ssub.s32 %s17, 1
        %p193 = scmp.lt.s32.totalorder %s26, 1
        %s194 = scalar_select %p193, %s26, 1
        %s195 = smul.addr %s194, 54
        %s196 = smul.addr %s195, 8
        %s197 = scalar_lea.vmem %s0, %s196
        %p198 = pneg %p55
        %p199 = pneg %p52
        %p200 = pneg %p76
        %p201 = pneg %p73
        %p202 = pneg %p104
        %p203 = pneg %p101
        %s204 = smul.u32 32, %s27
        %p205 = scmp.lt.s32.totalorder %s26, 1
        %s206 = scalar_select %p205, %s26, 1
        %p207 = scmp.lt.s32.totalorder %s204, 31
        %s208 = scalar_select %p207, %s204, 31
        %s209 = smul.addr %s206, 32
        %s210 = sadd.s32 %s208, %s209
        %s211 = smul.addr %s210, 8
        %s212 = scalar_lea.vmem %s2, %s211
        %p213 = pneg %p130
        %p214 = pneg %p127
        %s215 = sand.u32 %s117, 1
        %s216 = scalar_lea.sflag [#allocation3], %s215
        %s217 = sand.u32 %s117, 1
        %s218 = scalar_lea.vmem [#allocation2], %s217
        %p219 = pneg %p156
        %p220 = pneg %p153
        %s221 = sand.u32 %s143, 1
        %s222 = scalar_lea.sflag [#allocation5], %s221
        %s223 = sand.u32 %s143, 1
        %s224 = scalar_lea.vmem [#allocation4], %s223
        %p225 = scmp.lt.s32.totalorder %s26, 1
        %s226 = scalar_select %p225, %s26, 1
        %s227 = smul.addr %s226, 54
        %s228 = smul.addr %s227, 8
        %s229 = scalar_lea.vmem %s0, %s228
        %s230 = smul.u32 32, %s27
        %p231 = scmp.lt.s32.totalorder %s26, 1
        %s232 = scalar_select %p231, %s26, 1
        %p233 = scmp.lt.s32.totalorder %s230, 31
        %s234 = scalar_select %p233, %s230, 31
        %s235 = smul.addr %s232, 32
        %s236 = sadd.s32 %s234, %s235
        %s237 = smul.addr %s236, 8
        %s238 = scalar_lea.vmem %s2, %s237
        %s239 = smul.u32 32, %s27
        %s240 = smul.u32 %s27, 16
        %s241 = smul.u32 %s240, 24
        %s242 = scalar_lea.vmem %s229, %s241
        %v243 = vld [vmem:[%s242] sm:$0xff]
        %v244 = vld [vmem:[%s242 + $0x8] sm:$0xff]
        %v245 = vld [vmem:[%s242 + $0x18] sm:$0xff]
        %v246 = vld [vmem:[%s242 + $0x20] sm:$0xff]
        %v247 = vld [vmem:[%s242 + $0x30] sm:$0xff]
        %v248 = vld [vmem:[%s242 + $0x38] sm:$0xff]
        %v249 = vld [vmem:[%s242 + $0x48] sm:$0xff]
        %v250 = vld [vmem:[%s242 + $0x50] sm:$0xff]
        %v251 = vld [vmem:[%s242 + $0x60] sm:$0xff]
        %v252 = vld [vmem:[%s242 + $0x68] sm:$0xff]
        %v253 = vld [vmem:[%s242 + $0x78] sm:$0xff]
        %v254 = vld [vmem:[%s242 + $0x80] sm:$0xff]
        %v255 = vld [vmem:[%s242 + $0x90] sm:$0xff]
        %v256 = vld [vmem:[%s242 + $0x98] sm:$0xff]
        %v257 = vld [vmem:[%s242 + $0xa8] sm:$0xff]
        %v258 = vld [vmem:[%s242 + $0xb0] sm:$0xff]
        %v259 = vld [vmem:[%s242 + $0xc0] sm:$0xff]
        %v260 = vld [vmem:[%s242 + $0xc8] sm:$0xff]
        %v261 = vld [vmem:[%s242 + $0xd8] sm:$0xff]
        %v262 = vld [vmem:[%s242 + $0xe0] sm:$0xff]
        %v263 = vld [vmem:[%s242 + $0xf0] sm:$0xff]
        %v264 = vld [vmem:[%s242 + $0xf8] sm:$0xff]
        %v265 = vld [vmem:[%s242 + $0x108] sm:$0xff]
        %v266 = vld [vmem:[%s242 + $0x110] sm:$0xff]
        %v267 = vld [vmem:[%s242 + $0x120] sm:$0xff]
        %v268 = vld [vmem:[%s242 + $0x128] sm:$0xff]
        %v269 = vld [vmem:[%s242 + $0x138] sm:$0xff]
        %v270 = vld [vmem:[%s242 + $0x140] sm:$0xff]
        %v271 = vld [vmem:[%s242 + $0x150] sm:$0xff]
        %v272 = vld [vmem:[%s242 + $0x158] sm:$0xff]
        %v273 = vld [vmem:[%s242 + $0x168] sm:$0xff]
        %v274 = vld [vmem:[%s242 + $0x170] sm:$0xff]
        %v275 = vld [vmem:[%s1] sm:$0xf]
        %v276 = vld [vmem:[%s242 + $0x1] sm:$0xff]
        %v277 = vld [vmem:[%s242 + $0x9] sm:$0xff]
        %v278 = vld [vmem:[%s242 + $0x19] sm:$0xff]
        %v279 = vld [vmem:[%s242 + $0x21] sm:$0xff]
        %v280 = vld [vmem:[%s242 + $0x31] sm:$0xff]
        %v281 = vld [vmem:[%s242 + $0x39] sm:$0xff]
        %v282 = vld [vmem:[%s242 + $0x49] sm:$0xff]
        %v283 = vld [vmem:[%s242 + $0x51] sm:$0xff]
        %v284 = vld [vmem:[%s242 + $0x61] sm:$0xff]
        %v285 = vld [vmem:[%s242 + $0x69] sm:$0xff]
        %v286 = vld [vmem:[%s242 + $0x79] sm:$0xff]
        %v287 = vld [vmem:[%s242 + $0x81] sm:$0xff]
        %v288 = vld [vmem:[%s242 + $0x91] sm:$0xff]
        %v289 = vld [vmem:[%s242 + $0x99] sm:$0xff]
        %v290 = vld [vmem:[%s242 + $0xa9] sm:$0xff]
        %v291 = vld [vmem:[%s242 + $0xb1] sm:$0xff]
        %v292 = vld [vmem:[%s242 + $0xc1] sm:$0xff]
        %v293 = vld [vmem:[%s242 + $0xc9] sm:$0xff]
        %v294 = vld [vmem:[%s242 + $0xd9] sm:$0xff]
        %v295 = vld [vmem:[%s242 + $0xe1] sm:$0xff]
        %v296 = vld [vmem:[%s242 + $0xf1] sm:$0xff]
        %v297 = vld [vmem:[%s242 + $0xf9] sm:$0xff]
        %v298 = vld [vmem:[%s242 + $0x109] sm:$0xff]
        %v299 = vld [vmem:[%s242 + $0x111] sm:$0xff]
        %v300 = vld [vmem:[%s242 + $0x121] sm:$0xff]
        %v301 = vld [vmem:[%s242 + $0x129] sm:$0xff]
        %v302 = vld [vmem:[%s242 + $0x139] sm:$0xff]
        %v303 = vld [vmem:[%s242 + $0x141] sm:$0xff]
        %v304 = vld [vmem:[%s242 + $0x151] sm:$0xff]
        %v305 = vld [vmem:[%s242 + $0x159] sm:$0xff]
        %v306 = vld [vmem:[%s242 + $0x169] sm:$0xff]
        %v307 = vld [vmem:[%s242 + $0x171] sm:$0xff]
        %s308 = scalar_lea.vmem %s1, 4
        %v309 = vld [vmem:[%s308] sm:$0xf]
        %vm310 = vcmask 31744
        %v312 = vsel %vm310, %v276, 0
        %v315 = vsel %vm310, %v277, 0
        %v318 = vsel %vm310, %v278, 0
        %v321 = vsel %vm310, %v279, 0
        %v324 = vsel %vm310, %v280, 0
        %v327 = vsel %vm310, %v281, 0
        %v330 = vsel %vm310, %v282, 0
        %v333 = vsel %vm310, %v283, 0
        %v336 = vsel %vm310, %v284, 0
        %v339 = vsel %vm310, %v285, 0
        %v342 = vsel %vm310, %v286, 0
        %v345 = vsel %vm310, %v287, 0
        %v348 = vsel %vm310, %v288, 0
        %v351 = vsel %vm310, %v289, 0
        %v354 = vsel %vm310, %v290, 0
        %v357 = vsel %vm310, %v291, 0
        %v360 = vsel %vm310, %v292, 0
        %v363 = vsel %vm310, %v293, 0
        %v366 = vsel %vm310, %v294, 0
        %v369 = vsel %vm310, %v295, 0
        %v372 = vsel %vm310, %v296, 0
        %v375 = vsel %vm310, %v297, 0
        %v378 = vsel %vm310, %v298, 0
        %v381 = vsel %vm310, %v299, 0
        %v384 = vsel %vm310, %v300, 0
        %v387 = vsel %vm310, %v301, 0
        %v390 = vsel %vm310, %v302, 0
        %v393 = vsel %vm310, %v303, 0
        %v396 = vsel %vm310, %v304, 0
        %v399 = vsel %vm310, %v305, 0
        %v402 = vsel %vm310, %v306, 0
        %v405 = vsel %vm310, %v307, 0
        %vm407 = vcmask 1043456
        %v409 = vsel %vm407, %v309, 0
        %411 = vmatpush.msra.mxu0 0.0
        %412 = vmatpush.msra.mxu0 0.0
        %413 = vmatpush.msra.mxu0 0.0
        %414 = vmatpush.msra.mxu0 0.0
        %415 = vmatpush.msra.mxu0 0.0
        %416 = vmatpush.msra.mxu0 0.0
        %417 = vmatpush.msra.mxu0 0.0
        %418 = vmatpush.msra.mxu0 0.0
        %419 = vmatpush.msra.mxu0 0.0
        %420 = vmatpush.msra.mxu0 0.0
        %421 = vmatpush.msra.mxu0 0.0
        %422 = vmatpush.msra.mxu0 0.0
        %423 = vmatpush.msra.mxu0 0.0
        %424 = vmatpush.msra.mxu0 0.0
        %425 = vmatpush.msra.mxu0 0.0
        %426 = vmatpush.msra.mxu0 %v409
        %427 = vmatmul.f32.gmra.mxu0 %v312
        %v428 = vpop.f32.mrf.mxu0
        %v429 = vadd.f32 0.0, %v428
        %430 = vmatmul.f32.gmra.mxu0 %v315
        %v431 = vpop.f32.mrf.mxu0
        %v432 = vadd.f32 0.0, %v431
        %433 = vmatmul.f32.gmra.mxu0 %v318
        %v434 = vpop.f32.mrf.mxu0
        %v435 = vadd.f32 0.0, %v434
        %436 = vmatmul.f32.gmra.mxu0 %v321
        %v437 = vpop.f32.mrf.mxu0
        %v438 = vadd.f32 0.0, %v437
        %439 = vmatmul.f32.gmra.mxu0 %v324
        %v440 = vpop.f32.mrf.mxu0
        %v441 = vadd.f32 0.0, %v440
        %442 = vmatmul.f32.gmra.mxu0 %v327
        %v443 = vpop.f32.mrf.mxu0
        %v444 = vadd.f32 0.0, %v443
        %445 = vmatmul.f32.gmra.mxu0 %v330
        %v446 = vpop.f32.mrf.mxu0
        %v447 = vadd.f32 0.0, %v446
        %448 = vmatmul.f32.gmra.mxu0 %v333
        %v449 = vpop.f32.mrf.mxu0
        %v450 = vadd.f32 0.0, %v449
        %451 = vmatmul.f32.gmra.mxu0 %v336
        %v452 = vpop.f32.mrf.mxu0
        %v453 = vadd.f32 0.0, %v452
        %454 = vmatmul.f32.gmra.mxu0 %v339
        %v455 = vpop.f32.mrf.mxu0
        %v456 = vadd.f32 0.0, %v455
        %457 = vmatmul.f32.gmra.mxu0 %v342
        %v458 = vpop.f32.mrf.mxu0
        %v459 = vadd.f32 0.0, %v458
        %460 = vmatmul.f32.gmra.mxu0 %v345
        %v461 = vpop.f32.mrf.mxu0
        %v462 = vadd.f32 0.0, %v461
        %463 = vmatmul.f32.gmra.mxu0 %v348
        %v464 = vpop.f32.mrf.mxu0
        %v465 = vadd.f32 0.0, %v464
        %466 = vmatmul.f32.gmra.mxu0 %v351
        %v467 = vpop.f32.mrf.mxu0
        %v468 = vadd.f32 0.0, %v467
        %469 = vmatmul.f32.gmra.mxu0 %v354
        %v470 = vpop.f32.mrf.mxu0
        %v471 = vadd.f32 0.0, %v470
        %472 = vmatmul.f32.gmra.mxu0 %v357
        %v473 = vpop.f32.mrf.mxu0
        %v474 = vadd.f32 0.0, %v473
        %475 = vmatmul.f32.gmra.mxu0 %v360
        %v476 = vpop.f32.mrf.mxu0
        %v477 = vadd.f32 0.0, %v476
        %478 = vmatmul.f32.gmra.mxu0 %v363
        %v479 = vpop.f32.mrf.mxu0
        %v480 = vadd.f32 0.0, %v479
        %481 = vmatmul.f32.gmra.mxu0 %v366
        %v482 = vpop.f32.mrf.mxu0
        %v483 = vadd.f32 0.0, %v482
        %484 = vmatmul.f32.gmra.mxu0 %v369
        %v485 = vpop.f32.mrf.mxu0
        %v486 = vadd.f32 0.0, %v485
        %487 = vmatmul.f32.gmra.mxu0 %v372
        %v488 = vpop.f32.mrf.mxu0
        %v489 = vadd.f32 0.0, %v488
        %490 = vmatmul.f32.gmra.mxu0 %v375
        %v491 = vpop.f32.mrf.mxu0
        %v492 = vadd.f32 0.0, %v491
        %493 = vmatmul.f32.gmra.mxu0 %v378
        %v494 = vpop.f32.mrf.mxu0
        %v495 = vadd.f32 0.0, %v494
        %496 = vmatmul.f32.gmra.mxu0 %v381
        %v497 = vpop.f32.mrf.mxu0
        %v498 = vadd.f32 0.0, %v497
        %499 = vmatmul.f32.gmra.mxu0 %v384
        %v500 = vpop.f32.mrf.mxu0
        %v501 = vadd.f32 0.0, %v500
        %502 = vmatmul.f32.gmra.mxu0 %v387
        %v503 = vpop.f32.mrf.mxu0
        %v504 = vadd.f32 0.0, %v503
        %505 = vmatmul.f32.gmra.mxu0 %v390
        %v506 = vpop.f32.mrf.mxu0
        %v507 = vadd.f32 0.0, %v506
        %508 = vmatmul.f32.gmra.mxu0 %v393
        %v509 = vpop.f32.mrf.mxu0
        %v510 = vadd.f32 0.0, %v509
        %511 = vmatmul.f32.gmra.mxu0 %v396
        %v512 = vpop.f32.mrf.mxu0
        %v513 = vadd.f32 0.0, %v512
        %514 = vmatmul.f32.gmra.mxu0 %v399
        %v515 = vpop.f32.mrf.mxu0
        %v516 = vadd.f32 0.0, %v515
        %517 = vmatmul.f32.gmra.mxu0 %v402
        %v518 = vpop.f32.mrf.mxu0
        %v519 = vadd.f32 0.0, %v518
        %520 = vmatmul.f32.gmra.mxu0 %v405
        %v521 = vpop.f32.mrf.mxu0
        %v522 = vadd.f32 0.0, %v521
        %523 = vdwg.mxu0
        %v525 = vsel %vm310, %v243, 0
        %v528 = vsel %vm310, %v244, 0
        %v531 = vsel %vm310, %v245, 0
        %v534 = vsel %vm310, %v246, 0
        %v537 = vsel %vm310, %v247, 0
        %v540 = vsel %vm310, %v248, 0
        %v543 = vsel %vm310, %v249, 0
        %v546 = vsel %vm310, %v250, 0
        %v549 = vsel %vm310, %v251, 0
        %v552 = vsel %vm310, %v252, 0
        %v555 = vsel %vm310, %v253, 0
        %v558 = vsel %vm310, %v254, 0
        %v561 = vsel %vm310, %v255, 0
        %v564 = vsel %vm310, %v256, 0
        %v567 = vsel %vm310, %v257, 0
        %v570 = vsel %vm310, %v258, 0
        %v573 = vsel %vm310, %v259, 0
        %v576 = vsel %vm310, %v260, 0
        %v579 = vsel %vm310, %v261, 0
        %v582 = vsel %vm310, %v262, 0
        %v585 = vsel %vm310, %v263, 0
        %v588 = vsel %vm310, %v264, 0
        %v591 = vsel %vm310, %v265, 0
        %v594 = vsel %vm310, %v266, 0
        %v597 = vsel %vm310, %v267, 0
        %v600 = vsel %vm310, %v268, 0
        %v603 = vsel %vm310, %v269, 0
        %v606 = vsel %vm310, %v270, 0
        %v609 = vsel %vm310, %v271, 0
        %v612 = vsel %vm310, %v272, 0
        %v615 = vsel %vm310, %v273, 0
        %v618 = vsel %vm310, %v274, 0
        %v621 = vsel %vm407, %v275, 0
        %623 = vmatpush.msra.mxu0 0.0
        %624 = vmatpush.msra.mxu0 0.0
        %625 = vmatpush.msra.mxu0 0.0
        %626 = vmatpush.msra.mxu0 0.0
        %627 = vmatpush.msra.mxu0 0.0
        %628 = vmatpush.msra.mxu0 0.0
        %629 = vmatpush.msra.mxu0 0.0
        %630 = vmatpush.msra.mxu0 0.0
        %631 = vmatpush.msra.mxu0 0.0
        %632 = vmatpush.msra.mxu0 0.0
        %633 = vmatpush.msra.mxu0 0.0
        %634 = vmatpush.msra.mxu0 0.0
        %635 = vmatpush.msra.mxu0 0.0
        %636 = vmatpush.msra.mxu0 0.0
        %637 = vmatpush.msra.mxu0 0.0
        %638 = vmatpush.msra.mxu0 %v621
        %639 = vmatmul.f32.gmra.mxu0 %v525
        %v640 = vpop.f32.mrf.mxu0
        %v641 = vadd.f32 %v429, %v640
        %642 = vmatmul.f32.gmra.mxu0 %v528
        %v643 = vpop.f32.mrf.mxu0
        %v644 = vadd.f32 %v432, %v643
        %645 = vmatmul.f32.gmra.mxu0 %v531
        %v646 = vpop.f32.mrf.mxu0
        %v647 = vadd.f32 %v435, %v646
        %648 = vmatmul.f32.gmra.mxu0 %v534
        %v649 = vpop.f32.mrf.mxu0
        %v650 = vadd.f32 %v438, %v649
        %651 = vmatmul.f32.gmra.mxu0 %v537
        %v652 = vpop.f32.mrf.mxu0
        %v653 = vadd.f32 %v441, %v652
        %654 = vmatmul.f32.gmra.mxu0 %v540
        %v655 = vpop.f32.mrf.mxu0
        %v656 = vadd.f32 %v444, %v655
        %657 = vmatmul.f32.gmra.mxu0 %v543
        %v658 = vpop.f32.mrf.mxu0
        %v659 = vadd.f32 %v447, %v658
        %660 = vmatmul.f32.gmra.mxu0 %v546
        %v661 = vpop.f32.mrf.mxu0
        %v662 = vadd.f32 %v450, %v661
        %663 = vmatmul.f32.gmra.mxu0 %v549
        %v664 = vpop.f32.mrf.mxu0
        %v665 = vadd.f32 %v453, %v664
        %666 = vmatmul.f32.gmra.mxu0 %v552
        %v667 = vpop.f32.mrf.mxu0
        %v668 = vadd.f32 %v456, %v667
        %669 = vmatmul.f32.gmra.mxu0 %v555
        %v670 = vpop.f32.mrf.mxu0
        %v671 = vadd.f32 %v459, %v670
        %672 = vmatmul.f32.gmra.mxu0 %v558
        %v673 = vpop.f32.mrf.mxu0
        %v674 = vadd.f32 %v462, %v673
        %675 = vmatmul.f32.gmra.mxu0 %v561
        %v676 = vpop.f32.mrf.mxu0
        %v677 = vadd.f32 %v465, %v676
        %678 = vmatmul.f32.gmra.mxu0 %v564
        %v679 = vpop.f32.mrf.mxu0
        %v680 = vadd.f32 %v468, %v679
        %681 = vmatmul.f32.gmra.mxu0 %v567
        %v682 = vpop.f32.mrf.mxu0
        %v683 = vadd.f32 %v471, %v682
        %684 = vmatmul.f32.gmra.mxu0 %v570
        %v685 = vpop.f32.mrf.mxu0
        %v686 = vadd.f32 %v474, %v685
        %687 = vmatmul.f32.gmra.mxu0 %v573
        %v688 = vpop.f32.mrf.mxu0
        %v689 = vadd.f32 %v477, %v688
        %690 = vmatmul.f32.gmra.mxu0 %v576
        %v691 = vpop.f32.mrf.mxu0
        %v692 = vadd.f32 %v480, %v691
        %693 = vmatmul.f32.gmra.mxu0 %v579
        %v694 = vpop.f32.mrf.mxu0
        %v695 = vadd.f32 %v483, %v694
        %696 = vmatmul.f32.gmra.mxu0 %v582
        %v697 = vpop.f32.mrf.mxu0
        %v698 = vadd.f32 %v486, %v697
        %699 = vmatmul.f32.gmra.mxu0 %v585
        %v700 = vpop.f32.mrf.mxu0
        %v701 = vadd.f32 %v489, %v700
        %702 = vmatmul.f32.gmra.mxu0 %v588
        %v703 = vpop.f32.mrf.mxu0
        %v704 = vadd.f32 %v492, %v703
        %705 = vmatmul.f32.gmra.mxu0 %v591
        %v706 = vpop.f32.mrf.mxu0
        %v707 = vadd.f32 %v495, %v706
        %708 = vmatmul.f32.gmra.mxu0 %v594
        %v709 = vpop.f32.mrf.mxu0
        %v710 = vadd.f32 %v498, %v709
        %711 = vmatmul.f32.gmra.mxu0 %v597
        %v712 = vpop.f32.mrf.mxu0
        %v713 = vadd.f32 %v501, %v712
        %714 = vmatmul.f32.gmra.mxu0 %v600
        %v715 = vpop.f32.mrf.mxu0
        %v716 = vadd.f32 %v504, %v715
        %717 = vmatmul.f32.gmra.mxu0 %v603
        %v718 = vpop.f32.mrf.mxu0
        %v719 = vadd.f32 %v507, %v718
        %720 = vmatmul.f32.gmra.mxu0 %v606
        %v721 = vpop.f32.mrf.mxu0
        %v722 = vadd.f32 %v510, %v721
        %723 = vmatmul.f32.gmra.mxu0 %v609
        %v724 = vpop.f32.mrf.mxu0
        %v725 = vadd.f32 %v513, %v724
        %726 = vmatmul.f32.gmra.mxu0 %v612
        %v727 = vpop.f32.mrf.mxu0
        %v728 = vadd.f32 %v516, %v727
        %729 = vmatmul.f32.gmra.mxu0 %v615
        %v730 = vpop.f32.mrf.mxu0
        %v731 = vadd.f32 %v519, %v730
        %732 = vmatmul.f32.gmra.mxu0 %v618
        %v733 = vpop.f32.mrf.mxu0
        %v734 = vadd.f32 %v522, %v733
        %735 = vdwg.mxu0
        %v736 = vld [vmem:[%s242 + $0x2] sm:$0xff]
        %v737 = vld [vmem:[%s242 + $0xa] sm:$0xff]
        %v738 = vld [vmem:[%s242 + $0x1a] sm:$0xff]
        %v739 = vld [vmem:[%s242 + $0x22] sm:$0xff]
        %v740 = vld [vmem:[%s242 + $0x32] sm:$0xff]
        %v741 = vld [vmem:[%s242 + $0x3a] sm:$0xff]
        %v742 = vld [vmem:[%s242 + $0x4a] sm:$0xff]
        %v743 = vld [vmem:[%s242 + $0x52] sm:$0xff]
        %v744 = vld [vmem:[%s242 + $0x62] sm:$0xff]
        %v745 = vld [vmem:[%s242 + $0x6a] sm:$0xff]
        %v746 = vld [vmem:[%s242 + $0x7a] sm:$0xff]
        %v747 = vld [vmem:[%s242 + $0x82] sm:$0xff]
        %v748 = vld [vmem:[%s242 + $0x92] sm:$0xff]
        %v749 = vld [vmem:[%s242 + $0x9a] sm:$0xff]
        %v750 = vld [vmem:[%s242 + $0xaa] sm:$0xff]
        %v751 = vld [vmem:[%s242 + $0xb2] sm:$0xff]
        %v752 = vld [vmem:[%s242 + $0xc2] sm:$0xff]
        %v753 = vld [vmem:[%s242 + $0xca] sm:$0xff]
        %v754 = vld [vmem:[%s242 + $0xda] sm:$0xff]
        %v755 = vld [vmem:[%s242 + $0xe2] sm:$0xff]
        %v756 = vld [vmem:[%s242 + $0xf2] sm:$0xff]
        %v757 = vld [vmem:[%s242 + $0xfa] sm:$0xff]
        %v758 = vld [vmem:[%s242 + $0x10a] sm:$0xff]
        %v759 = vld [vmem:[%s242 + $0x112] sm:$0xff]
        %v760 = vld [vmem:[%s242 + $0x122] sm:$0xff]
        %v761 = vld [vmem:[%s242 + $0x12a] sm:$0xff]
        %v762 = vld [vmem:[%s242 + $0x13a] sm:$0xff]
        %v763 = vld [vmem:[%s242 + $0x142] sm:$0xff]
        %v764 = vld [vmem:[%s242 + $0x152] sm:$0xff]
        %v765 = vld [vmem:[%s242 + $0x15a] sm:$0xff]
        %v766 = vld [vmem:[%s242 + $0x16a] sm:$0xff]
        %v767 = vld [vmem:[%s242 + $0x172] sm:$0xff]
        %s768 = scalar_lea.vmem %s1, 8
        %v769 = vld [vmem:[%s768] sm:$0xf]
        %v771 = vsel %vm310, %v736, 0
        %v774 = vsel %vm310, %v737, 0
        %v777 = vsel %vm310, %v738, 0
        %v780 = vsel %vm310, %v739, 0
        %v783 = vsel %vm310, %v740, 0
        %v786 = vsel %vm310, %v741, 0
        %v789 = vsel %vm310, %v742, 0
        %v792 = vsel %vm310, %v743, 0
        %v795 = vsel %vm310, %v744, 0
        %v798 = vsel %vm310, %v745, 0
        %v801 = vsel %vm310, %v746, 0
        %v804 = vsel %vm310, %v747, 0
        %v807 = vsel %vm310, %v748, 0
        %v810 = vsel %vm310, %v749, 0
        %v813 = vsel %vm310, %v750, 0
        %v816 = vsel %vm310, %v751, 0
        %v819 = vsel %vm310, %v752, 0
        %v822 = vsel %vm310, %v753, 0
        %v825 = vsel %vm310, %v754, 0
        %v828 = vsel %vm310, %v755, 0
        %v831 = vsel %vm310, %v756, 0
        %v834 = vsel %vm310, %v757, 0
        %v837 = vsel %vm310, %v758, 0
        %v840 = vsel %vm310, %v759, 0
        %v843 = vsel %vm310, %v760, 0
        %v846 = vsel %vm310, %v761, 0
        %v849 = vsel %vm310, %v762, 0
        %v852 = vsel %vm310, %v763, 0
        %v855 = vsel %vm310, %v764, 0
        %v858 = vsel %vm310, %v765, 0
        %v861 = vsel %vm310, %v766, 0
        %v864 = vsel %vm310, %v767, 0
        %v867 = vsel %vm407, %v769, 0
        %869 = vmatpush.msra.mxu0 0.0
        %870 = vmatpush.msra.mxu0 0.0
        %871 = vmatpush.msra.mxu0 0.0
        %872 = vmatpush.msra.mxu0 0.0
        %873 = vmatpush.msra.mxu0 0.0
        %874 = vmatpush.msra.mxu0 0.0
        %875 = vmatpush.msra.mxu0 0.0
        %876 = vmatpush.msra.mxu0 0.0
        %877 = vmatpush.msra.mxu0 0.0
        %878 = vmatpush.msra.mxu0 0.0
        %879 = vmatpush.msra.mxu0 0.0
        %880 = vmatpush.msra.mxu0 0.0
        %881 = vmatpush.msra.mxu0 0.0
        %882 = vmatpush.msra.mxu0 0.0
        %883 = vmatpush.msra.mxu0 0.0
        %884 = vmatpush.msra.mxu0 %v867
        %885 = vmatmul.f32.gmra.mxu0 %v771
        %v886 = vpop.f32.mrf.mxu0
        %v887 = vadd.f32 0.0, %v886
        %888 = vmatmul.f32.gmra.mxu0 %v774
        %v889 = vpop.f32.mrf.mxu0
        %v890 = vadd.f32 0.0, %v889
        %891 = vmatmul.f32.gmra.mxu0 %v777
        %v892 = vpop.f32.mrf.mxu0
        %v893 = vadd.f32 0.0, %v892
        %894 = vmatmul.f32.gmra.mxu0 %v780
        %v895 = vpop.f32.mrf.mxu0
        %v896 = vadd.f32 0.0, %v895
        %897 = vmatmul.f32.gmra.mxu0 %v783
        %v898 = vpop.f32.mrf.mxu0
        %v899 = vadd.f32 0.0, %v898
        %900 = vmatmul.f32.gmra.mxu0 %v786
        %v901 = vpop.f32.mrf.mxu0
        %v902 = vadd.f32 0.0, %v901
        %903 = vmatmul.f32.gmra.mxu0 %v789
        %v904 = vpop.f32.mrf.mxu0
        %v905 = vadd.f32 0.0, %v904
        %906 = vmatmul.f32.gmra.mxu0 %v792
        %v907 = vpop.f32.mrf.mxu0
        %v908 = vadd.f32 0.0, %v907
        %909 = vmatmul.f32.gmra.mxu0 %v795
        %v910 = vpop.f32.mrf.mxu0
        %v911 = vadd.f32 0.0, %v910
        %912 = vmatmul.f32.gmra.mxu0 %v798
        %v913 = vpop.f32.mrf.mxu0
        %v914 = vadd.f32 0.0, %v913
        %915 = vmatmul.f32.gmra.mxu0 %v801
        %v916 = vpop.f32.mrf.mxu0
        %v917 = vadd.f32 0.0, %v916
        %918 = vmatmul.f32.gmra.mxu0 %v804
        %v919 = vpop.f32.mrf.mxu0
        %v920 = vadd.f32 0.0, %v919
        %921 = vmatmul.f32.gmra.mxu0 %v807
        %v922 = vpop.f32.mrf.mxu0
        %v923 = vadd.f32 0.0, %v922
        %924 = vmatmul.f32.gmra.mxu0 %v810
        %v925 = vpop.f32.mrf.mxu0
        %v926 = vadd.f32 0.0, %v925
        %927 = vmatmul.f32.gmra.mxu0 %v813
        %v928 = vpop.f32.mrf.mxu0
        %v929 = vadd.f32 0.0, %v928
        %930 = vmatmul.f32.gmra.mxu0 %v816
        %v931 = vpop.f32.mrf.mxu0
        %v932 = vadd.f32 0.0, %v931
        %933 = vmatmul.f32.gmra.mxu0 %v819
        %v934 = vpop.f32.mrf.mxu0
        %v935 = vadd.f32 0.0, %v934
        %936 = vmatmul.f32.gmra.mxu0 %v822
        %v937 = vpop.f32.mrf.mxu0
        %v938 = vadd.f32 0.0, %v937
        %939 = vmatmul.f32.gmra.mxu0 %v825
        %v940 = vpop.f32.mrf.mxu0
        %v941 = vadd.f32 0.0, %v940
        %942 = vmatmul.f32.gmra.mxu0 %v828
        %v943 = vpop.f32.mrf.mxu0
        %v944 = vadd.f32 0.0, %v943
        %945 = vmatmul.f32.gmra.mxu0 %v831
        %v946 = vpop.f32.mrf.mxu0
        %v947 = vadd.f32 0.0, %v946
        %948 = vmatmul.f32.gmra.mxu0 %v834
        %v949 = vpop.f32.mrf.mxu0
        %v950 = vadd.f32 0.0, %v949
        %951 = vmatmul.f32.gmra.mxu0 %v837
        %v952 = vpop.f32.mrf.mxu0
        %v953 = vadd.f32 0.0, %v952
        %954 = vmatmul.f32.gmra.mxu0 %v840
        %v955 = vpop.f32.mrf.mxu0
        %v956 = vadd.f32 0.0, %v955
        %957 = vmatmul.f32.gmra.mxu0 %v843
        %v958 = vpop.f32.mrf.mxu0
        %v959 = vadd.f32 0.0, %v958
        %960 = vmatmul.f32.gmra.mxu0 %v846
        %v961 = vpop.f32.mrf.mxu0
        %v962 = vadd.f32 0.0, %v961
        %963 = vmatmul.f32.gmra.mxu0 %v849
        %v964 = vpop.f32.mrf.mxu0
        %v965 = vadd.f32 0.0, %v964
        %966 = vmatmul.f32.gmra.mxu0 %v852
        %v967 = vpop.f32.mrf.mxu0
        %v968 = vadd.f32 0.0, %v967
        %969 = vmatmul.f32.gmra.mxu0 %v855
        %v970 = vpop.f32.mrf.mxu0
        %v971 = vadd.f32 0.0, %v970
        %972 = vmatmul.f32.gmra.mxu0 %v858
        %v973 = vpop.f32.mrf.mxu0
        %v974 = vadd.f32 0.0, %v973
        %975 = vmatmul.f32.gmra.mxu0 %v861
        %v976 = vpop.f32.mrf.mxu0
        %v977 = vadd.f32 0.0, %v976
        %978 = vmatmul.f32.gmra.mxu0 %v864
        %v979 = vpop.f32.mrf.mxu0
        %v980 = vadd.f32 0.0, %v979
        %981 = vdwg.mxu0
        %v982 = vadd.f32 %v641, %v887
        %v983 = vadd.f32 %v644, %v890
        %v984 = vadd.f32 %v647, %v893
        %v985 = vadd.f32 %v650, %v896
        %v986 = vadd.f32 %v653, %v899
        %v987 = vadd.f32 %v656, %v902
        %v988 = vadd.f32 %v659, %v905
        %v989 = vadd.f32 %v662, %v908
        %v990 = vadd.f32 %v665, %v911
        %v991 = vadd.f32 %v668, %v914
        %v992 = vadd.f32 %v671, %v917
        %v993 = vadd.f32 %v674, %v920
        %v994 = vadd.f32 %v677, %v923
        %v995 = vadd.f32 %v680, %v926
        %v996 = vadd.f32 %v683, %v929
        %v997 = vadd.f32 %v686, %v932
        %v998 = vadd.f32 %v689, %v935
        %v999 = vadd.f32 %v692, %v938
        %v1000 = vadd.f32 %v695, %v941
        %v1001 = vadd.f32 %v698, %v944
        %v1002 = vadd.f32 %v701, %v947
        %v1003 = vadd.f32 %v704, %v950
        %v1004 = vadd.f32 %v707, %v953
        %v1005 = vadd.f32 %v710, %v956
        %v1006 = vadd.f32 %v713, %v959
        %v1007 = vadd.f32 %v716, %v962
        %v1008 = vadd.f32 %v719, %v965
        %v1009 = vadd.f32 %v722, %v968
        %v1010 = vadd.f32 %v725, %v971
        %v1011 = vadd.f32 %v728, %v974
        %v1012 = vadd.f32 %v731, %v977
        %v1013 = vadd.f32 %v734, %v980
        %s1014 = sadd.s32 %s240, 1
        %s1015 = smul.u32 %s1014, 24
        %s1016 = scalar_lea.vmem %s229, %s1015
        %v1017 = vld [vmem:[%s1016] sm:$0xff]
        %v1018 = vld [vmem:[%s1016 + $0x8] sm:$0xff]
        %v1019 = vld [vmem:[%s1016 + $0x18] sm:$0xff]
        %v1020 = vld [vmem:[%s1016 + $0x20] sm:$0xff]
        %v1021 = vld [vmem:[%s1016 + $0x30] sm:$0xff]
        %v1022 = vld [vmem:[%s1016 + $0x38] sm:$0xff]
        %v1023 = vld [vmem:[%s1016 + $0x48] sm:$0xff]
        %v1024 = vld [vmem:[%s1016 + $0x50] sm:$0xff]
        %v1025 = vld [vmem:[%s1016 + $0x60] sm:$0xff]
        %v1026 = vld [vmem:[%s1016 + $0x68] sm:$0xff]
        %v1027 = vld [vmem:[%s1016 + $0x78] sm:$0xff]
        %v1028 = vld [vmem:[%s1016 + $0x80] sm:$0xff]
        %v1029 = vld [vmem:[%s1016 + $0x90] sm:$0xff]
        %v1030 = vld [vmem:[%s1016 + $0x98] sm:$0xff]
        %v1031 = vld [vmem:[%s1016 + $0xa8] sm:$0xff]
        %v1032 = vld [vmem:[%s1016 + $0xb0] sm:$0xff]
        %v1033 = vld [vmem:[%s1016 + $0xc0] sm:$0xff]
        %v1034 = vld [vmem:[%s1016 + $0xc8] sm:$0xff]
        %v1035 = vld [vmem:[%s1016 + $0xd8] sm:$0xff]
        %v1036 = vld [vmem:[%s1016 + $0xe0] sm:$0xff]
        %v1037 = vld [vmem:[%s1016 + $0xf0] sm:$0xff]
        %v1038 = vld [vmem:[%s1016 + $0xf8] sm:$0xff]
        %v1039 = vld [vmem:[%s1016 + $0x108] sm:$0xff]
        %v1040 = vld [vmem:[%s1016 + $0x110] sm:$0xff]
        %v1041 = vld [vmem:[%s1016 + $0x120] sm:$0xff]
        %v1042 = vld [vmem:[%s1016 + $0x128] sm:$0xff]
        %v1043 = vld [vmem:[%s1016 + $0x138] sm:$0xff]
        %v1044 = vld [vmem:[%s1016 + $0x140] sm:$0xff]
        %v1045 = vld [vmem:[%s1016 + $0x150] sm:$0xff]
        %v1046 = vld [vmem:[%s1016 + $0x158] sm:$0xff]
        %v1047 = vld [vmem:[%s1016 + $0x168] sm:$0xff]
        %v1048 = vld [vmem:[%s1016 + $0x170] sm:$0xff]
        %s1049 = scalar_lea.vmem %s1, 12
        %v1050 = vld [vmem:[%s1049] sm:$0xf]
        %v1052 = vsel %vm310, %v1017, 0
        %v1055 = vsel %vm310, %v1018, 0
        %v1058 = vsel %vm310, %v1019, 0
        %v1061 = vsel %vm310, %v1020, 0
        %v1064 = vsel %vm310, %v1021, 0
        %v1067 = vsel %vm310, %v1022, 0
        %v1070 = vsel %vm310, %v1023, 0
        %v1073 = vsel %vm310, %v1024, 0
        %v1076 = vsel %vm310, %v1025, 0
        %v1079 = vsel %vm310, %v1026, 0
        %v1082 = vsel %vm310, %v1027, 0
        %v1085 = vsel %vm310, %v1028, 0
        %v1088 = vsel %vm310, %v1029, 0
        %v1091 = vsel %vm310, %v1030, 0
        %v1094 = vsel %vm310, %v1031, 0
        %v1097 = vsel %vm310, %v1032, 0
        %v1100 = vsel %vm310, %v1033, 0
        %v1103 = vsel %vm310, %v1034, 0
        %v1106 = vsel %vm310, %v1035, 0
        %v1109 = vsel %vm310, %v1036, 0
        %v1112 = vsel %vm310, %v1037, 0
        %v1115 = vsel %vm310, %v1038, 0
        %v1118 = vsel %vm310, %v1039, 0
        %v1121 = vsel %vm310, %v1040, 0
        %v1124 = vsel %vm310, %v1041, 0
        %v1127 = vsel %vm310, %v1042, 0
        %v1130 = vsel %vm310, %v1043, 0
        %v1133 = vsel %vm310, %v1044, 0
        %v1136 = vsel %vm310, %v1045, 0
        %v1139 = vsel %vm310, %v1046, 0
        %v1142 = vsel %vm310, %v1047, 0
        %v1145 = vsel %vm310, %v1048, 0
        %v1148 = vsel %vm407, %v1050, 0
        %1150 = vmatpush.msra.mxu0 0.0
        %1151 = vmatpush.msra.mxu0 0.0
        %1152 = vmatpush.msra.mxu0 0.0
        %1153 = vmatpush.msra.mxu0 0.0
        %1154 = vmatpush.msra.mxu0 0.0
        %1155 = vmatpush.msra.mxu0 0.0
        %1156 = vmatpush.msra.mxu0 0.0
        %1157 = vmatpush.msra.mxu0 0.0
        %1158 = vmatpush.msra.mxu0 0.0
        %1159 = vmatpush.msra.mxu0 0.0
        %1160 = vmatpush.msra.mxu0 0.0
        %1161 = vmatpush.msra.mxu0 0.0
        %1162 = vmatpush.msra.mxu0 0.0
        %1163 = vmatpush.msra.mxu0 0.0
        %1164 = vmatpush.msra.mxu0 0.0
        %1165 = vmatpush.msra.mxu0 %v1148
        %1166 = vmatmul.f32.gmra.mxu0 %v1052
        %v1167 = vpop.f32.mrf.mxu0
        %v1168 = vadd.f32 0.0, %v1167
        %1169 = vmatmul.f32.gmra.mxu0 %v1055
        %v1170 = vpop.f32.mrf.mxu0
        %v1171 = vadd.f32 0.0, %v1170
        %1172 = vmatmul.f32.gmra.mxu0 %v1058
        %v1173 = vpop.f32.mrf.mxu0
        %v1174 = vadd.f32 0.0, %v1173
        %1175 = vmatmul.f32.gmra.mxu0 %v1061
        %v1176 = vpop.f32.mrf.mxu0
        %v1177 = vadd.f32 0.0, %v1176
        %1178 = vmatmul.f32.gmra.mxu0 %v1064
        %v1179 = vpop.f32.mrf.mxu0
        %v1180 = vadd.f32 0.0, %v1179
        %1181 = vmatmul.f32.gmra.mxu0 %v1067
        %v1182 = vpop.f32.mrf.mxu0
        %v1183 = vadd.f32 0.0, %v1182
        %1184 = vmatmul.f32.gmra.mxu0 %v1070
        %v1185 = vpop.f32.mrf.mxu0
        %v1186 = vadd.f32 0.0, %v1185
        %1187 = vmatmul.f32.gmra.mxu0 %v1073
        %v1188 = vpop.f32.mrf.mxu0
        %v1189 = vadd.f32 0.0, %v1188
        %1190 = vmatmul.f32.gmra.mxu0 %v1076
        %v1191 = vpop.f32.mrf.mxu0
        %v1192 = vadd.f32 0.0, %v1191
        %1193 = vmatmul.f32.gmra.mxu0 %v1079
        %v1194 = vpop.f32.mrf.mxu0
        %v1195 = vadd.f32 0.0, %v1194
        %1196 = vmatmul.f32.gmra.mxu0 %v1082
        %v1197 = vpop.f32.mrf.mxu0
        %v1198 = vadd.f32 0.0, %v1197
        %1199 = vmatmul.f32.gmra.mxu0 %v1085
        %v1200 = vpop.f32.mrf.mxu0
        %v1201 = vadd.f32 0.0, %v1200
        %1202 = vmatmul.f32.gmra.mxu0 %v1088
        %v1203 = vpop.f32.mrf.mxu0
        %v1204 = vadd.f32 0.0, %v1203
        %1205 = vmatmul.f32.gmra.mxu0 %v1091
        %v1206 = vpop.f32.mrf.mxu0
        %v1207 = vadd.f32 0.0, %v1206
        %1208 = vmatmul.f32.gmra.mxu0 %v1094
        %v1209 = vpop.f32.mrf.mxu0
        %v1210 = vadd.f32 0.0, %v1209
        %1211 = vmatmul.f32.gmra.mxu0 %v1097
        %v1212 = vpop.f32.mrf.mxu0
        %v1213 = vadd.f32 0.0, %v1212
        %1214 = vmatmul.f32.gmra.mxu0 %v1100
        %v1215 = vpop.f32.mrf.mxu0
        %v1216 = vadd.f32 0.0, %v1215
        %1217 = vmatmul.f32.gmra.mxu0 %v1103
        %v1218 = vpop.f32.mrf.mxu0
        %v1219 = vadd.f32 0.0, %v1218
        %1220 = vmatmul.f32.gmra.mxu0 %v1106
        %v1221 = vpop.f32.mrf.mxu0
        %v1222 = vadd.f32 0.0, %v1221
        %1223 = vmatmul.f32.gmra.mxu0 %v1109
        %v1224 = vpop.f32.mrf.mxu0
        %v1225 = vadd.f32 0.0, %v1224
        %1226 = vmatmul.f32.gmra.mxu0 %v1112
        %v1227 = vpop.f32.mrf.mxu0
        %v1228 = vadd.f32 0.0, %v1227
        %1229 = vmatmul.f32.gmra.mxu0 %v1115
        %v1230 = vpop.f32.mrf.mxu0
        %v1231 = vadd.f32 0.0, %v1230
        %1232 = vmatmul.f32.gmra.mxu0 %v1118
        %v1233 = vpop.f32.mrf.mxu0
        %v1234 = vadd.f32 0.0, %v1233
        %1235 = vmatmul.f32.gmra.mxu0 %v1121
        %v1236 = vpop.f32.mrf.mxu0
        %v1237 = vadd.f32 0.0, %v1236
        %1238 = vmatmul.f32.gmra.mxu0 %v1124
        %v1239 = vpop.f32.mrf.mxu0
        %v1240 = vadd.f32 0.0, %v1239
        %1241 = vmatmul.f32.gmra.mxu0 %v1127
        %v1242 = vpop.f32.mrf.mxu0
        %v1243 = vadd.f32 0.0, %v1242
        %1244 = vmatmul.f32.gmra.mxu0 %v1130
        %v1245 = vpop.f32.mrf.mxu0
        %v1246 = vadd.f32 0.0, %v1245
        %1247 = vmatmul.f32.gmra.mxu0 %v1133
        %v1248 = vpop.f32.mrf.mxu0
        %v1249 = vadd.f32 0.0, %v1248
        %1250 = vmatmul.f32.gmra.mxu0 %v1136
        %v1251 = vpop.f32.mrf.mxu0
        %v1252 = vadd.f32 0.0, %v1251
        %1253 = vmatmul.f32.gmra.mxu0 %v1139
        %v1254 = vpop.f32.mrf.mxu0
        %v1255 = vadd.f32 0.0, %v1254
        %1256 = vmatmul.f32.gmra.mxu0 %v1142
        %v1257 = vpop.f32.mrf.mxu0
        %v1258 = vadd.f32 0.0, %v1257
        %1259 = vmatmul.f32.gmra.mxu0 %v1145
        %v1260 = vpop.f32.mrf.mxu0
        %v1261 = vadd.f32 0.0, %v1260
        %1262 = vdwg.mxu0
        %v1263 = vadd.f32 %v982, %v1168
        %v1264 = vadd.f32 %v983, %v1171
        %v1265 = vadd.f32 %v984, %v1174
        %v1266 = vadd.f32 %v985, %v1177
        %v1267 = vadd.f32 %v986, %v1180
        %v1268 = vadd.f32 %v987, %v1183
        %v1269 = vadd.f32 %v988, %v1186
        %v1270 = vadd.f32 %v989, %v1189
        %v1271 = vadd.f32 %v990, %v1192
        %v1272 = vadd.f32 %v991, %v1195
        %v1273 = vadd.f32 %v992, %v1198
        %v1274 = vadd.f32 %v993, %v1201
        %v1275 = vadd.f32 %v994, %v1204
        %v1276 = vadd.f32 %v995, %v1207
        %v1277 = vadd.f32 %v996, %v1210
        %v1278 = vadd.f32 %v997, %v1213
        %v1279 = vadd.f32 %v998, %v1216
        %v1280 = vadd.f32 %v999, %v1219
        %v1281 = vadd.f32 %v1000, %v1222
        %v1282 = vadd.f32 %v1001, %v1225
        %v1283 = vadd.f32 %v1002, %v1228
        %v1284 = vadd.f32 %v1003, %v1231
        %v1285 = vadd.f32 %v1004, %v1234
        %v1286 = vadd.f32 %v1005, %v1237
        %v1287 = vadd.f32 %v1006, %v1240
        %v1288 = vadd.f32 %v1007, %v1243
        %v1289 = vadd.f32 %v1008, %v1246
        %v1290 = vadd.f32 %v1009, %v1249
        %v1291 = vadd.f32 %v1010, %v1252
        %v1292 = vadd.f32 %v1011, %v1255
        %v1293 = vadd.f32 %v1012, %v1258
        %v1294 = vadd.f32 %v1013, %v1261
        %v1295 = vld [vmem:[%s1016 + $0x1] sm:$0xff]
        %v1296 = vld [vmem:[%s1016 + $0x9] sm:$0xff]
        %v1297 = vld [vmem:[%s1016 + $0x19] sm:$0xff]
        %v1298 = vld [vmem:[%s1016 + $0x21] sm:$0xff]
        %v1299 = vld [vmem:[%s1016 + $0x31] sm:$0xff]
        %v1300 = vld [vmem:[%s1016 + $0x39] sm:$0xff]
        %v1301 = vld [vmem:[%s1016 + $0x49] sm:$0xff]
        %v1302 = vld [vmem:[%s1016 + $0x51] sm:$0xff]
        %v1303 = vld [vmem:[%s1016 + $0x61] sm:$0xff]
        %v1304 = vld [vmem:[%s1016 + $0x69] sm:$0xff]
        %v1305 = vld [vmem:[%s1016 + $0x79] sm:$0xff]
        %v1306 = vld [vmem:[%s1016 + $0x81] sm:$0xff]
        %v1307 = vld [vmem:[%s1016 + $0x91] sm:$0xff]
        %v1308 = vld [vmem:[%s1016 + $0x99] sm:$0xff]
        %v1309 = vld [vmem:[%s1016 + $0xa9] sm:$0xff]
        %v1310 = vld [vmem:[%s1016 + $0xb1] sm:$0xff]
        %v1311 = vld [vmem:[%s1016 + $0xc1] sm:$0xff]
        %v1312 = vld [vmem:[%s1016 + $0xc9] sm:$0xff]
        %v1313 = vld [vmem:[%s1016 + $0xd9] sm:$0xff]
        %v1314 = vld [vmem:[%s1016 + $0xe1] sm:$0xff]
        %v1315 = vld [vmem:[%s1016 + $0xf1] sm:$0xff]
        %v1316 = vld [vmem:[%s1016 + $0xf9] sm:$0xff]
        %v1317 = vld [vmem:[%s1016 + $0x109] sm:$0xff]
        %v1318 = vld [vmem:[%s1016 + $0x111] sm:$0xff]
        %v1319 = vld [vmem:[%s1016 + $0x121] sm:$0xff]
        %v1320 = vld [vmem:[%s1016 + $0x129] sm:$0xff]
        %v1321 = vld [vmem:[%s1016 + $0x139] sm:$0xff]
        %v1322 = vld [vmem:[%s1016 + $0x141] sm:$0xff]
        %v1323 = vld [vmem:[%s1016 + $0x151] sm:$0xff]
        %v1324 = vld [vmem:[%s1016 + $0x159] sm:$0xff]
        %v1325 = vld [vmem:[%s1016 + $0x169] sm:$0xff]
        %v1326 = vld [vmem:[%s1016 + $0x171] sm:$0xff]
        %s1327 = scalar_lea.vmem %s1, 16
        %v1328 = vld [vmem:[%s1327] sm:$0xf]
        %v1330 = vsel %vm310, %v1295, 0
        %v1333 = vsel %vm310, %v1296, 0
        %v1336 = vsel %vm310, %v1297, 0
        %v1339 = vsel %vm310, %v1298, 0
        %v1342 = vsel %vm310, %v1299, 0
        %v1345 = vsel %vm310, %v1300, 0
        %v1348 = vsel %vm310, %v1301, 0
        %v1351 = vsel %vm310, %v1302, 0
        %v1354 = vsel %vm310, %v1303, 0
        %v1357 = vsel %vm310, %v1304, 0
        %v1360 = vsel %vm310, %v1305, 0
        %v1363 = vsel %vm310, %v1306, 0
        %v1366 = vsel %vm310, %v1307, 0
        %v1369 = vsel %vm310, %v1308, 0
        %v1372 = vsel %vm310, %v1309, 0
        %v1375 = vsel %vm310, %v1310, 0
        %v1378 = vsel %vm310, %v1311, 0
        %v1381 = vsel %vm310, %v1312, 0
        %v1384 = vsel %vm310, %v1313, 0
        %v1387 = vsel %vm310, %v1314, 0
        %v1390 = vsel %vm310, %v1315, 0
        %v1393 = vsel %vm310, %v1316, 0
        %v1396 = vsel %vm310, %v1317, 0
        %v1399 = vsel %vm310, %v1318, 0
        %v1402 = vsel %vm310, %v1319, 0
        %v1405 = vsel %vm310, %v1320, 0
        %v1408 = vsel %vm310, %v1321, 0
        %v1411 = vsel %vm310, %v1322, 0
        %v1414 = vsel %vm310, %v1323, 0
        %v1417 = vsel %vm310, %v1324, 0
        %v1420 = vsel %vm310, %v1325, 0
        %v1423 = vsel %vm310, %v1326, 0
        %v1426 = vsel %vm407, %v1328, 0
        %1428 = vmatpush.msra.mxu0 0.0
        %1429 = vmatpush.msra.mxu0 0.0
        %1430 = vmatpush.msra.mxu0 0.0
        %1431 = vmatpush.msra.mxu0 0.0
        %1432 = vmatpush.msra.mxu0 0.0
        %1433 = vmatpush.msra.mxu0 0.0
        %1434 = vmatpush.msra.mxu0 0.0
        %1435 = vmatpush.msra.mxu0 0.0
        %1436 = vmatpush.msra.mxu0 0.0
        %1437 = vmatpush.msra.mxu0 0.0
        %1438 = vmatpush.msra.mxu0 0.0
        %1439 = vmatpush.msra.mxu0 0.0
        %1440 = vmatpush.msra.mxu0 0.0
        %1441 = vmatpush.msra.mxu0 0.0
        %1442 = vmatpush.msra.mxu0 0.0
        %1443 = vmatpush.msra.mxu0 %v1426
        %1444 = vmatmul.f32.gmra.mxu0 %v1330
        %v1445 = vpop.f32.mrf.mxu0
        %v1446 = vadd.f32 0.0, %v1445
        %1447 = vmatmul.f32.gmra.mxu0 %v1333
        %v1448 = vpop.f32.mrf.mxu0
        %v1449 = vadd.f32 0.0, %v1448
        %1450 = vmatmul.f32.gmra.mxu0 %v1336
        %v1451 = vpop.f32.mrf.mxu0
        %v1452 = vadd.f32 0.0, %v1451
        %1453 = vmatmul.f32.gmra.mxu0 %v1339
        %v1454 = vpop.f32.mrf.mxu0
        %v1455 = vadd.f32 0.0, %v1454
        %1456 = vmatmul.f32.gmra.mxu0 %v1342
        %v1457 = vpop.f32.mrf.mxu0
        %v1458 = vadd.f32 0.0, %v1457
        %1459 = vmatmul.f32.gmra.mxu0 %v1345
        %v1460 = vpop.f32.mrf.mxu0
        %v1461 = vadd.f32 0.0, %v1460
        %1462 = vmatmul.f32.gmra.mxu0 %v1348
        %v1463 = vpop.f32.mrf.mxu0
        %v1464 = vadd.f32 0.0, %v1463
        %1465 = vmatmul.f32.gmra.mxu0 %v1351
        %v1466 = vpop.f32.mrf.mxu0
        %v1467 = vadd.f32 0.0, %v1466
        %1468 = vmatmul.f32.gmra.mxu0 %v1354
        %v1469 = vpop.f32.mrf.mxu0
        %v1470 = vadd.f32 0.0, %v1469
        %1471 = vmatmul.f32.gmra.mxu0 %v1357
        %v1472 = vpop.f32.mrf.mxu0
        %v1473 = vadd.f32 0.0, %v1472
        %1474 = vmatmul.f32.gmra.mxu0 %v1360
        %v1475 = vpop.f32.mrf.mxu0
        %v1476 = vadd.f32 0.0, %v1475
        %1477 = vmatmul.f32.gmra.mxu0 %v1363
        %v1478 = vpop.f32.mrf.mxu0
        %v1479 = vadd.f32 0.0, %v1478
        %1480 = vmatmul.f32.gmra.mxu0 %v1366
        %v1481 = vpop.f32.mrf.mxu0
        %v1482 = vadd.f32 0.0, %v1481
        %1483 = vmatmul.f32.gmra.mxu0 %v1369
        %v1484 = vpop.f32.mrf.mxu0
        %v1485 = vadd.f32 0.0, %v1484
        %1486 = vmatmul.f32.gmra.mxu0 %v1372
        %v1487 = vpop.f32.mrf.mxu0
        %v1488 = vadd.f32 0.0, %v1487
        %1489 = vmatmul.f32.gmra.mxu0 %v1375
        %v1490 = vpop.f32.mrf.mxu0
        %v1491 = vadd.f32 0.0, %v1490
        %1492 = vmatmul.f32.gmra.mxu0 %v1378
        %v1493 = vpop.f32.mrf.mxu0
        %v1494 = vadd.f32 0.0, %v1493
        %1495 = vmatmul.f32.gmra.mxu0 %v1381
        %v1496 = vpop.f32.mrf.mxu0
        %v1497 = vadd.f32 0.0, %v1496
        %1498 = vmatmul.f32.gmra.mxu0 %v1384
        %v1499 = vpop.f32.mrf.mxu0
        %v1500 = vadd.f32 0.0, %v1499
        %1501 = vmatmul.f32.gmra.mxu0 %v1387
        %v1502 = vpop.f32.mrf.mxu0
        %v1503 = vadd.f32 0.0, %v1502
        %1504 = vmatmul.f32.gmra.mxu0 %v1390
        %v1505 = vpop.f32.mrf.mxu0
        %v1506 = vadd.f32 0.0, %v1505
        %1507 = vmatmul.f32.gmra.mxu0 %v1393
        %v1508 = vpop.f32.mrf.mxu0
        %v1509 = vadd.f32 0.0, %v1508
        %1510 = vmatmul.f32.gmra.mxu0 %v1396
        %v1511 = vpop.f32.mrf.mxu0
        %v1512 = vadd.f32 0.0, %v1511
        %1513 = vmatmul.f32.gmra.mxu0 %v1399
        %v1514 = vpop.f32.mrf.mxu0
        %v1515 = vadd.f32 0.0, %v1514
        %1516 = vmatmul.f32.gmra.mxu0 %v1402
        %v1517 = vpop.f32.mrf.mxu0
        %v1518 = vadd.f32 0.0, %v1517
        %1519 = vmatmul.f32.gmra.mxu0 %v1405
        %v1520 = vpop.f32.mrf.mxu0
        %v1521 = vadd.f32 0.0, %v1520
        %1522 = vmatmul.f32.gmra.mxu0 %v1408
        %v1523 = vpop.f32.mrf.mxu0
        %v1524 = vadd.f32 0.0, %v1523
        %1525 = vmatmul.f32.gmra.mxu0 %v1411
        %v1526 = vpop.f32.mrf.mxu0
        %v1527 = vadd.f32 0.0, %v1526
        %1528 = vmatmul.f32.gmra.mxu0 %v1414
        %v1529 = vpop.f32.mrf.mxu0
        %v1530 = vadd.f32 0.0, %v1529
        %1531 = vmatmul.f32.gmra.mxu0 %v1417
        %v1532 = vpop.f32.mrf.mxu0
        %v1533 = vadd.f32 0.0, %v1532
        %1534 = vmatmul.f32.gmra.mxu0 %v1420
        %v1535 = vpop.f32.mrf.mxu0
        %v1536 = vadd.f32 0.0, %v1535
        %1537 = vmatmul.f32.gmra.mxu0 %v1423
        %v1538 = vpop.f32.mrf.mxu0
        %v1539 = vadd.f32 0.0, %v1538
        %1540 = vdwg.mxu0
        %v1541 = vadd.f32 %v1263, %v1446
        %v1542 = vadd.f32 %v1264, %v1449
        %v1543 = vadd.f32 %v1265, %v1452
        %v1544 = vadd.f32 %v1266, %v1455
        %v1545 = vadd.f32 %v1267, %v1458
        %v1546 = vadd.f32 %v1268, %v1461
        %v1547 = vadd.f32 %v1269, %v1464
        %v1548 = vadd.f32 %v1270, %v1467
        %v1549 = vadd.f32 %v1271, %v1470
        %v1550 = vadd.f32 %v1272, %v1473
        %v1551 = vadd.f32 %v1273, %v1476
        %v1552 = vadd.f32 %v1274, %v1479
        %v1553 = vadd.f32 %v1275, %v1482
        %v1554 = vadd.f32 %v1276, %v1485
        %v1555 = vadd.f32 %v1277, %v1488
        %v1556 = vadd.f32 %v1278, %v1491
        %v1557 = vadd.f32 %v1279, %v1494
        %v1558 = vadd.f32 %v1280, %v1497
        %v1559 = vadd.f32 %v1281, %v1500
        %v1560 = vadd.f32 %v1282, %v1503
        %v1561 = vadd.f32 %v1283, %v1506
        %v1562 = vadd.f32 %v1284, %v1509
        %v1563 = vadd.f32 %v1285, %v1512
        %v1564 = vadd.f32 %v1286, %v1515
        %v1565 = vadd.f32 %v1287, %v1518
        %v1566 = vadd.f32 %v1288, %v1521
        %v1567 = vadd.f32 %v1289, %v1524
        %v1568 = vadd.f32 %v1290, %v1527
        %v1569 = vadd.f32 %v1291, %v1530
        %v1570 = vadd.f32 %v1292, %v1533
        %v1571 = vadd.f32 %v1293, %v1536
        %v1572 = vadd.f32 %v1294, %v1539
        %v1573 = vld [vmem:[%s1016 + $0x2] sm:$0xff]
        %v1574 = vld [vmem:[%s1016 + $0xa] sm:$0xff]
        %v1575 = vld [vmem:[%s1016 + $0x1a] sm:$0xff]
        %v1576 = vld [vmem:[%s1016 + $0x22] sm:$0xff]
        %v1577 = vld [vmem:[%s1016 + $0x32] sm:$0xff]
        %v1578 = vld [vmem:[%s1016 + $0x3a] sm:$0xff]
        %v1579 = vld [vmem:[%s1016 + $0x4a] sm:$0xff]
        %v1580 = vld [vmem:[%s1016 + $0x52] sm:$0xff]
        %v1581 = vld [vmem:[%s1016 + $0x62] sm:$0xff]
        %v1582 = vld [vmem:[%s1016 + $0x6a] sm:$0xff]
        %v1583 = vld [vmem:[%s1016 + $0x7a] sm:$0xff]
        %v1584 = vld [vmem:[%s1016 + $0x82] sm:$0xff]
        %v1585 = vld [vmem:[%s1016 + $0x92] sm:$0xff]
        %v1586 = vld [vmem:[%s1016 + $0x9a] sm:$0xff]
        %v1587 = vld [vmem:[%s1016 + $0xaa] sm:$0xff]
        %v1588 = vld [vmem:[%s1016 + $0xb2] sm:$0xff]
        %v1589 = vld [vmem:[%s1016 + $0xc2] sm:$0xff]
        %v1590 = vld [vmem:[%s1016 + $0xca] sm:$0xff]
        %v1591 = vld [vmem:[%s1016 + $0xda] sm:$0xff]
        %v1592 = vld [vmem:[%s1016 + $0xe2] sm:$0xff]
        %v1593 = vld [vmem:[%s1016 + $0xf2] sm:$0xff]
        %v1594 = vld [vmem:[%s1016 + $0xfa] sm:$0xff]
        %v1595 = vld [vmem:[%s1016 + $0x10a] sm:$0xff]
        %v1596 = vld [vmem:[%s1016 + $0x112] sm:$0xff]
        %v1597 = vld [vmem:[%s1016 + $0x122] sm:$0xff]
        %v1598 = vld [vmem:[%s1016 + $0x12a] sm:$0xff]
        %v1599 = vld [vmem:[%s1016 + $0x13a] sm:$0xff]
        %v1600 = vld [vmem:[%s1016 + $0x142] sm:$0xff]
        %v1601 = vld [vmem:[%s1016 + $0x152] sm:$0xff]
        %v1602 = vld [vmem:[%s1016 + $0x15a] sm:$0xff]
        %v1603 = vld [vmem:[%s1016 + $0x16a] sm:$0xff]
        %v1604 = vld [vmem:[%s1016 + $0x172] sm:$0xff]
        %s1605 = scalar_lea.vmem %s1, 20
        %v1606 = vld [vmem:[%s1605] sm:$0xf]
        %v1608 = vsel %vm310, %v1573, 0
        %v1611 = vsel %vm310, %v1574, 0
        %v1614 = vsel %vm310, %v1575, 0
        %v1617 = vsel %vm310, %v1576, 0
        %v1620 = vsel %vm310, %v1577, 0
        %v1623 = vsel %vm310, %v1578, 0
        %v1626 = vsel %vm310, %v1579, 0
        %v1629 = vsel %vm310, %v1580, 0
        %v1632 = vsel %vm310, %v1581, 0
        %v1635 = vsel %vm310, %v1582, 0
        %v1638 = vsel %vm310, %v1583, 0
        %v1641 = vsel %vm310, %v1584, 0
        %v1644 = vsel %vm310, %v1585, 0
        %v1647 = vsel %vm310, %v1586, 0
        %v1650 = vsel %vm310, %v1587, 0
        %v1653 = vsel %vm310, %v1588, 0
        %v1656 = vsel %vm310, %v1589, 0
        %v1659 = vsel %vm310, %v1590, 0
        %v1662 = vsel %vm310, %v1591, 0
        %v1665 = vsel %vm310, %v1592, 0
        %v1668 = vsel %vm310, %v1593, 0
        %v1671 = vsel %vm310, %v1594, 0
        %v1674 = vsel %vm310, %v1595, 0
        %v1677 = vsel %vm310, %v1596, 0
        %v1680 = vsel %vm310, %v1597, 0
        %v1683 = vsel %vm310, %v1598, 0
        %v1686 = vsel %vm310, %v1599, 0
        %v1689 = vsel %vm310, %v1600, 0
        %v1692 = vsel %vm310, %v1601, 0
        %v1695 = vsel %vm310, %v1602, 0
        %v1698 = vsel %vm310, %v1603, 0
        %v1701 = vsel %vm310, %v1604, 0
        %v1704 = vsel %vm407, %v1606, 0
        %1706 = vmatpush.msra.mxu0 0.0
        %1707 = vmatpush.msra.mxu0 0.0
        %1708 = vmatpush.msra.mxu0 0.0
        %1709 = vmatpush.msra.mxu0 0.0
        %1710 = vmatpush.msra.mxu0 0.0
        %1711 = vmatpush.msra.mxu0 0.0
        %1712 = vmatpush.msra.mxu0 0.0
        %1713 = vmatpush.msra.mxu0 0.0
        %1714 = vmatpush.msra.mxu0 0.0
        %1715 = vmatpush.msra.mxu0 0.0
        %1716 = vmatpush.msra.mxu0 0.0
        %1717 = vmatpush.msra.mxu0 0.0
        %1718 = vmatpush.msra.mxu0 0.0
        %1719 = vmatpush.msra.mxu0 0.0
        %1720 = vmatpush.msra.mxu0 0.0
        %1721 = vmatpush.msra.mxu0 %v1704
        %1722 = vmatmul.f32.gmra.mxu0 %v1608
        %v1723 = vpop.f32.mrf.mxu0
        %v1724 = vadd.f32 0.0, %v1723
        %1725 = vmatmul.f32.gmra.mxu0 %v1611
        %v1726 = vpop.f32.mrf.mxu0
        %v1727 = vadd.f32 0.0, %v1726
        %1728 = vmatmul.f32.gmra.mxu0 %v1614
        %v1729 = vpop.f32.mrf.mxu0
        %v1730 = vadd.f32 0.0, %v1729
        %1731 = vmatmul.f32.gmra.mxu0 %v1617
        %v1732 = vpop.f32.mrf.mxu0
        %v1733 = vadd.f32 0.0, %v1732
        %1734 = vmatmul.f32.gmra.mxu0 %v1620
        %v1735 = vpop.f32.mrf.mxu0
        %v1736 = vadd.f32 0.0, %v1735
        %1737 = vmatmul.f32.gmra.mxu0 %v1623
        %v1738 = vpop.f32.mrf.mxu0
        %v1739 = vadd.f32 0.0, %v1738
        %1740 = vmatmul.f32.gmra.mxu0 %v1626
        %v1741 = vpop.f32.mrf.mxu0
        %v1742 = vadd.f32 0.0, %v1741
        %1743 = vmatmul.f32.gmra.mxu0 %v1629
        %v1744 = vpop.f32.mrf.mxu0
        %v1745 = vadd.f32 0.0, %v1744
        %1746 = vmatmul.f32.gmra.mxu0 %v1632
        %v1747 = vpop.f32.mrf.mxu0
        %v1748 = vadd.f32 0.0, %v1747
        %1749 = vmatmul.f32.gmra.mxu0 %v1635
        %v1750 = vpop.f32.mrf.mxu0
        %v1751 = vadd.f32 0.0, %v1750
        %1752 = vmatmul.f32.gmra.mxu0 %v1638
        %v1753 = vpop.f32.mrf.mxu0
        %v1754 = vadd.f32 0.0, %v1753
        %1755 = vmatmul.f32.gmra.mxu0 %v1641
        %v1756 = vpop.f32.mrf.mxu0
        %v1757 = vadd.f32 0.0, %v1756
        %1758 = vmatmul.f32.gmra.mxu0 %v1644
        %v1759 = vpop.f32.mrf.mxu0
        %v1760 = vadd.f32 0.0, %v1759
        %1761 = vmatmul.f32.gmra.mxu0 %v1647
        %v1762 = vpop.f32.mrf.mxu0
        %v1763 = vadd.f32 0.0, %v1762
        %1764 = vmatmul.f32.gmra.mxu0 %v1650
        %v1765 = vpop.f32.mrf.mxu0
        %v1766 = vadd.f32 0.0, %v1765
        %1767 = vmatmul.f32.gmra.mxu0 %v1653
        %v1768 = vpop.f32.mrf.mxu0
        %v1769 = vadd.f32 0.0, %v1768
        %1770 = vmatmul.f32.gmra.mxu0 %v1656
        %v1771 = vpop.f32.mrf.mxu0
        %v1772 = vadd.f32 0.0, %v1771
        %1773 = vmatmul.f32.gmra.mxu0 %v1659
        %v1774 = vpop.f32.mrf.mxu0
        %v1775 = vadd.f32 0.0, %v1774
        %1776 = vmatmul.f32.gmra.mxu0 %v1662
        %v1777 = vpop.f32.mrf.mxu0
        %v1778 = vadd.f32 0.0, %v1777
        %1779 = vmatmul.f32.gmra.mxu0 %v1665
        %v1780 = vpop.f32.mrf.mxu0
        %v1781 = vadd.f32 0.0, %v1780
        %1782 = vmatmul.f32.gmra.mxu0 %v1668
        %v1783 = vpop.f32.mrf.mxu0
        %v1784 = vadd.f32 0.0, %v1783
        %1785 = vmatmul.f32.gmra.mxu0 %v1671
        %v1786 = vpop.f32.mrf.mxu0
        %v1787 = vadd.f32 0.0, %v1786
        %1788 = vmatmul.f32.gmra.mxu0 %v1674
        %v1789 = vpop.f32.mrf.mxu0
        %v1790 = vadd.f32 0.0, %v1789
        %1791 = vmatmul.f32.gmra.mxu0 %v1677
        %v1792 = vpop.f32.mrf.mxu0
        %v1793 = vadd.f32 0.0, %v1792
        %1794 = vmatmul.f32.gmra.mxu0 %v1680
        %v1795 = vpop.f32.mrf.mxu0
        %v1796 = vadd.f32 0.0, %v1795
        %1797 = vmatmul.f32.gmra.mxu0 %v1683
        %v1798 = vpop.f32.mrf.mxu0
        %v1799 = vadd.f32 0.0, %v1798
        %1800 = vmatmul.f32.gmra.mxu0 %v1686
        %v1801 = vpop.f32.mrf.mxu0
        %v1802 = vadd.f32 0.0, %v1801
        %1803 = vmatmul.f32.gmra.mxu0 %v1689
        %v1804 = vpop.f32.mrf.mxu0
        %v1805 = vadd.f32 0.0, %v1804
        %1806 = vmatmul.f32.gmra.mxu0 %v1692
        %v1807 = vpop.f32.mrf.mxu0
        %v1808 = vadd.f32 0.0, %v1807
        %1809 = vmatmul.f32.gmra.mxu0 %v1695
        %v1810 = vpop.f32.mrf.mxu0
        %v1811 = vadd.f32 0.0, %v1810
        %1812 = vmatmul.f32.gmra.mxu0 %v1698
        %v1813 = vpop.f32.mrf.mxu0
        %v1814 = vadd.f32 0.0, %v1813
        %1815 = vmatmul.f32.gmra.mxu0 %v1701
        %v1816 = vpop.f32.mrf.mxu0
        %v1817 = vadd.f32 0.0, %v1816
        %1818 = vdwg.mxu0
        %v1819 = vadd.f32 %v1541, %v1724
        %v1820 = vadd.f32 %v1542, %v1727
        %v1821 = vadd.f32 %v1543, %v1730
        %v1822 = vadd.f32 %v1544, %v1733
        %v1823 = vadd.f32 %v1545, %v1736
        %v1824 = vadd.f32 %v1546, %v1739
        %v1825 = vadd.f32 %v1547, %v1742
        %v1826 = vadd.f32 %v1548, %v1745
        %v1827 = vadd.f32 %v1549, %v1748
        %v1828 = vadd.f32 %v1550, %v1751
        %v1829 = vadd.f32 %v1551, %v1754
        %v1830 = vadd.f32 %v1552, %v1757
        %v1831 = vadd.f32 %v1553, %v1760
        %v1832 = vadd.f32 %v1554, %v1763
        %v1833 = vadd.f32 %v1555, %v1766
        %v1834 = vadd.f32 %v1556, %v1769
        %v1835 = vadd.f32 %v1557, %v1772
        %v1836 = vadd.f32 %v1558, %v1775
        %v1837 = vadd.f32 %v1559, %v1778
        %v1838 = vadd.f32 %v1560, %v1781
        %v1839 = vadd.f32 %v1561, %v1784
        %v1840 = vadd.f32 %v1562, %v1787
        %v1841 = vadd.f32 %v1563, %v1790
        %v1842 = vadd.f32 %v1564, %v1793
        %v1843 = vadd.f32 %v1565, %v1796
        %v1844 = vadd.f32 %v1566, %v1799
        %v1845 = vadd.f32 %v1567, %v1802
        %v1846 = vadd.f32 %v1568, %v1805
        %v1847 = vadd.f32 %v1569, %v1808
        %v1848 = vadd.f32 %v1570, %v1811
        %v1849 = vadd.f32 %v1571, %v1814
        %v1850 = vadd.f32 %v1572, %v1817
        %s1851 = sadd.s32 %s240, 2
        %s1852 = smul.u32 %s1851, 24
        %s1853 = scalar_lea.vmem %s229, %s1852
        %v1854 = vld [vmem:[%s1853] sm:$0xff]
        %v1855 = vld [vmem:[%s1853 + $0x8] sm:$0xff]
        %v1856 = vld [vmem:[%s1853 + $0x18] sm:$0xff]
        %v1857 = vld [vmem:[%s1853 + $0x20] sm:$0xff]
        %v1858 = vld [vmem:[%s1853 + $0x30] sm:$0xff]
        %v1859 = vld [vmem:[%s1853 + $0x38] sm:$0xff]
        %v1860 = vld [vmem:[%s1853 + $0x48] sm:$0xff]
        %v1861 = vld [vmem:[%s1853 + $0x50] sm:$0xff]
        %v1862 = vld [vmem:[%s1853 + $0x60] sm:$0xff]
        %v1863 = vld [vmem:[%s1853 + $0x68] sm:$0xff]
        %v1864 = vld [vmem:[%s1853 + $0x78] sm:$0xff]
        %v1865 = vld [vmem:[%s1853 + $0x80] sm:$0xff]
        %v1866 = vld [vmem:[%s1853 + $0x90] sm:$0xff]
        %v1867 = vld [vmem:[%s1853 + $0x98] sm:$0xff]
        %v1868 = vld [vmem:[%s1853 + $0xa8] sm:$0xff]
        %v1869 = vld [vmem:[%s1853 + $0xb0] sm:$0xff]
        %v1870 = vld [vmem:[%s1853 + $0xc0] sm:$0xff]
        %v1871 = vld [vmem:[%s1853 + $0xc8] sm:$0xff]
        %v1872 = vld [vmem:[%s1853 + $0xd8] sm:$0xff]
        %v1873 = vld [vmem:[%s1853 + $0xe0] sm:$0xff]
        %v1874 = vld [vmem:[%s1853 + $0xf0] sm:$0xff]
        %v1875 = vld [vmem:[%s1853 + $0xf8] sm:$0xff]
        %v1876 = vld [vmem:[%s1853 + $0x108] sm:$0xff]
        %v1877 = vld [vmem:[%s1853 + $0x110] sm:$0xff]
        %v1878 = vld [vmem:[%s1853 + $0x120] sm:$0xff]
        %v1879 = vld [vmem:[%s1853 + $0x128] sm:$0xff]
        %v1880 = vld [vmem:[%s1853 + $0x138] sm:$0xff]
        %v1881 = vld [vmem:[%s1853 + $0x140] sm:$0xff]
        %v1882 = vld [vmem:[%s1853 + $0x150] sm:$0xff]
        %v1883 = vld [vmem:[%s1853 + $0x158] sm:$0xff]
        %v1884 = vld [vmem:[%s1853 + $0x168] sm:$0xff]
        %v1885 = vld [vmem:[%s1853 + $0x170] sm:$0xff]
        %s1886 = scalar_lea.vmem %s1, 24
        %v1887 = vld [vmem:[%s1886] sm:$0xf]
        %v1889 = vsel %vm310, %v1854, 0
        %v1892 = vsel %vm310, %v1855, 0
        %v1895 = vsel %vm310, %v1856, 0
        %v1898 = vsel %vm310, %v1857, 0
        %v1901 = vsel %vm310, %v1858, 0
        %v1904 = vsel %vm310, %v1859, 0
        %v1907 = vsel %vm310, %v1860, 0
        %v1910 = vsel %vm310, %v1861, 0
        %v1913 = vsel %vm310, %v1862, 0
        %v1916 = vsel %vm310, %v1863, 0
        %v1919 = vsel %vm310, %v1864, 0
        %v1922 = vsel %vm310, %v1865, 0
        %v1925 = vsel %vm310, %v1866, 0
        %v1928 = vsel %vm310, %v1867, 0
        %v1931 = vsel %vm310, %v1868, 0
        %v1934 = vsel %vm310, %v1869, 0
        %v1937 = vsel %vm310, %v1870, 0
        %v1940 = vsel %vm310, %v1871, 0
        %v1943 = vsel %vm310, %v1872, 0
        %v1946 = vsel %vm310, %v1873, 0
        %v1949 = vsel %vm310, %v1874, 0
        %v1952 = vsel %vm310, %v1875, 0
        %v1955 = vsel %vm310, %v1876, 0
        %v1958 = vsel %vm310, %v1877, 0
        %v1961 = vsel %vm310, %v1878, 0
        %v1964 = vsel %vm310, %v1879, 0
        %v1967 = vsel %vm310, %v1880, 0
        %v1970 = vsel %vm310, %v1881, 0
        %v1973 = vsel %vm310, %v1882, 0
        %v1976 = vsel %vm310, %v1883, 0
        %v1979 = vsel %vm310, %v1884, 0
        %v1982 = vsel %vm310, %v1885, 0
        %v1985 = vsel %vm407, %v1887, 0
        %1987 = vmatpush.msra.mxu0 0.0
        %1988 = vmatpush.msra.mxu0 0.0
        %1989 = vmatpush.msra.mxu0 0.0
        %1990 = vmatpush.msra.mxu0 0.0
        %1991 = vmatpush.msra.mxu0 0.0
        %1992 = vmatpush.msra.mxu0 0.0
        %1993 = vmatpush.msra.mxu0 0.0
        %1994 = vmatpush.msra.mxu0 0.0
        %1995 = vmatpush.msra.mxu0 0.0
        %1996 = vmatpush.msra.mxu0 0.0
        %1997 = vmatpush.msra.mxu0 0.0
        %1998 = vmatpush.msra.mxu0 0.0
        %1999 = vmatpush.msra.mxu0 0.0
        %2000 = vmatpush.msra.mxu0 0.0
        %2001 = vmatpush.msra.mxu0 0.0
        %2002 = vmatpush.msra.mxu0 %v1985
        %2003 = vmatmul.f32.gmra.mxu0 %v1889
        %v2004 = vpop.f32.mrf.mxu0
        %v2005 = vadd.f32 0.0, %v2004
        %2006 = vmatmul.f32.gmra.mxu0 %v1892
        %v2007 = vpop.f32.mrf.mxu0
        %v2008 = vadd.f32 0.0, %v2007
        %2009 = vmatmul.f32.gmra.mxu0 %v1895
        %v2010 = vpop.f32.mrf.mxu0
        %v2011 = vadd.f32 0.0, %v2010
        %2012 = vmatmul.f32.gmra.mxu0 %v1898
        %v2013 = vpop.f32.mrf.mxu0
        %v2014 = vadd.f32 0.0, %v2013
        %2015 = vmatmul.f32.gmra.mxu0 %v1901
        %v2016 = vpop.f32.mrf.mxu0
        %v2017 = vadd.f32 0.0, %v2016
        %2018 = vmatmul.f32.gmra.mxu0 %v1904
        %v2019 = vpop.f32.mrf.mxu0
        %v2020 = vadd.f32 0.0, %v2019
        %2021 = vmatmul.f32.gmra.mxu0 %v1907
        %v2022 = vpop.f32.mrf.mxu0
        %v2023 = vadd.f32 0.0, %v2022
        %2024 = vmatmul.f32.gmra.mxu0 %v1910
        %v2025 = vpop.f32.mrf.mxu0
        %v2026 = vadd.f32 0.0, %v2025
        %2027 = vmatmul.f32.gmra.mxu0 %v1913
        %v2028 = vpop.f32.mrf.mxu0
        %v2029 = vadd.f32 0.0, %v2028
        %2030 = vmatmul.f32.gmra.mxu0 %v1916
        %v2031 = vpop.f32.mrf.mxu0
        %v2032 = vadd.f32 0.0, %v2031
        %2033 = vmatmul.f32.gmra.mxu0 %v1919
        %v2034 = vpop.f32.mrf.mxu0
        %v2035 = vadd.f32 0.0, %v2034
        %2036 = vmatmul.f32.gmra.mxu0 %v1922
        %v2037 = vpop.f32.mrf.mxu0
        %v2038 = vadd.f32 0.0, %v2037
        %2039 = vmatmul.f32.gmra.mxu0 %v1925
        %v2040 = vpop.f32.mrf.mxu0
        %v2041 = vadd.f32 0.0, %v2040
        %2042 = vmatmul.f32.gmra.mxu0 %v1928
        %v2043 = vpop.f32.mrf.mxu0
        %v2044 = vadd.f32 0.0, %v2043
        %2045 = vmatmul.f32.gmra.mxu0 %v1931
        %v2046 = vpop.f32.mrf.mxu0
        %v2047 = vadd.f32 0.0, %v2046
        %2048 = vmatmul.f32.gmra.mxu0 %v1934
        %v2049 = vpop.f32.mrf.mxu0
        %v2050 = vadd.f32 0.0, %v2049
        %2051 = vmatmul.f32.gmra.mxu0 %v1937
        %v2052 = vpop.f32.mrf.mxu0
        %v2053 = vadd.f32 0.0, %v2052
        %2054 = vmatmul.f32.gmra.mxu0 %v1940
        %v2055 = vpop.f32.mrf.mxu0
        %v2056 = vadd.f32 0.0, %v2055
        %2057 = vmatmul.f32.gmra.mxu0 %v1943
        %v2058 = vpop.f32.mrf.mxu0
        %v2059 = vadd.f32 0.0, %v2058
        %2060 = vmatmul.f32.gmra.mxu0 %v1946
        %v2061 = vpop.f32.mrf.mxu0
        %v2062 = vadd.f32 0.0, %v2061
        %2063 = vmatmul.f32.gmra.mxu0 %v1949
        %v2064 = vpop.f32.mrf.mxu0
        %v2065 = vadd.f32 0.0, %v2064
        %2066 = vmatmul.f32.gmra.mxu0 %v1952
        %v2067 = vpop.f32.mrf.mxu0
        %v2068 = vadd.f32 0.0, %v2067
        %2069 = vmatmul.f32.gmra.mxu0 %v1955
        %v2070 = vpop.f32.mrf.mxu0
        %v2071 = vadd.f32 0.0, %v2070
        %2072 = vmatmul.f32.gmra.mxu0 %v1958
        %v2073 = vpop.f32.mrf.mxu0
        %v2074 = vadd.f32 0.0, %v2073
        %2075 = vmatmul.f32.gmra.mxu0 %v1961
        %v2076 = vpop.f32.mrf.mxu0
        %v2077 = vadd.f32 0.0, %v2076
        %2078 = vmatmul.f32.gmra.mxu0 %v1964
        %v2079 = vpop.f32.mrf.mxu0
        %v2080 = vadd.f32 0.0, %v2079
        %2081 = vmatmul.f32.gmra.mxu0 %v1967
        %v2082 = vpop.f32.mrf.mxu0
        %v2083 = vadd.f32 0.0, %v2082
        %2084 = vmatmul.f32.gmra.mxu0 %v1970
        %v2085 = vpop.f32.mrf.mxu0
        %v2086 = vadd.f32 0.0, %v2085
        %2087 = vmatmul.f32.gmra.mxu0 %v1973
        %v2088 = vpop.f32.mrf.mxu0
        %v2089 = vadd.f32 0.0, %v2088
        %2090 = vmatmul.f32.gmra.mxu0 %v1976
        %v2091 = vpop.f32.mrf.mxu0
        %v2092 = vadd.f32 0.0, %v2091
        %2093 = vmatmul.f32.gmra.mxu0 %v1979
        %v2094 = vpop.f32.mrf.mxu0
        %v2095 = vadd.f32 0.0, %v2094
        %2096 = vmatmul.f32.gmra.mxu0 %v1982
        %v2097 = vpop.f32.mrf.mxu0
        %v2098 = vadd.f32 0.0, %v2097
        %2099 = vdwg.mxu0
        %v2100 = vadd.f32 %v1819, %v2005
        %v2101 = vadd.f32 %v1820, %v2008
        %v2102 = vadd.f32 %v1821, %v2011
        %v2103 = vadd.f32 %v1822, %v2014
        %v2104 = vadd.f32 %v1823, %v2017
        %v2105 = vadd.f32 %v1824, %v2020
        %v2106 = vadd.f32 %v1825, %v2023
        %v2107 = vadd.f32 %v1826, %v2026
        %v2108 = vadd.f32 %v1827, %v2029
        %v2109 = vadd.f32 %v1828, %v2032
        %v2110 = vadd.f32 %v1829, %v2035
        %v2111 = vadd.f32 %v1830, %v2038
        %v2112 = vadd.f32 %v1831, %v2041
        %v2113 = vadd.f32 %v1832, %v2044
        %v2114 = vadd.f32 %v1833, %v2047
        %v2115 = vadd.f32 %v1834, %v2050
        %v2116 = vadd.f32 %v1835, %v2053
        %v2117 = vadd.f32 %v1836, %v2056
        %v2118 = vadd.f32 %v1837, %v2059
        %v2119 = vadd.f32 %v1838, %v2062
        %v2120 = vadd.f32 %v1839, %v2065
        %v2121 = vadd.f32 %v1840, %v2068
        %v2122 = vadd.f32 %v1841, %v2071
        %v2123 = vadd.f32 %v1842, %v2074
        %v2124 = vadd.f32 %v1843, %v2077
        %v2125 = vadd.f32 %v1844, %v2080
        %v2126 = vadd.f32 %v1845, %v2083
        %v2127 = vadd.f32 %v1846, %v2086
        %v2128 = vadd.f32 %v1847, %v2089
        %v2129 = vadd.f32 %v1848, %v2092
        %v2130 = vadd.f32 %v1849, %v2095
        %v2131 = vadd.f32 %v1850, %v2098
        %v2132 = vld [vmem:[%s1853 + $0x1] sm:$0xff]
        %v2133 = vld [vmem:[%s1853 + $0x9] sm:$0xff]
        %v2134 = vld [vmem:[%s1853 + $0x19] sm:$0xff]
        %v2135 = vld [vmem:[%s1853 + $0x21] sm:$0xff]
        %v2136 = vld [vmem:[%s1853 + $0x31] sm:$0xff]
        %v2137 = vld [vmem:[%s1853 + $0x39] sm:$0xff]
        %v2138 = vld [vmem:[%s1853 + $0x49] sm:$0xff]
        %v2139 = vld [vmem:[%s1853 + $0x51] sm:$0xff]
        %v2140 = vld [vmem:[%s1853 + $0x61] sm:$0xff]
        %v2141 = vld [vmem:[%s1853 + $0x69] sm:$0xff]
        %v2142 = vld [vmem:[%s1853 + $0x79] sm:$0xff]
        %v2143 = vld [vmem:[%s1853 + $0x81] sm:$0xff]
        %v2144 = vld [vmem:[%s1853 + $0x91] sm:$0xff]
        %v2145 = vld [vmem:[%s1853 + $0x99] sm:$0xff]
        %v2146 = vld [vmem:[%s1853 + $0xa9] sm:$0xff]
        %v2147 = vld [vmem:[%s1853 + $0xb1] sm:$0xff]
        %v2148 = vld [vmem:[%s1853 + $0xc1] sm:$0xff]
        %v2149 = vld [vmem:[%s1853 + $0xc9] sm:$0xff]
        %v2150 = vld [vmem:[%s1853 + $0xd9] sm:$0xff]
        %v2151 = vld [vmem:[%s1853 + $0xe1] sm:$0xff]
        %v2152 = vld [vmem:[%s1853 + $0xf1] sm:$0xff]
        %v2153 = vld [vmem:[%s1853 + $0xf9] sm:$0xff]
        %v2154 = vld [vmem:[%s1853 + $0x109] sm:$0xff]
        %v2155 = vld [vmem:[%s1853 + $0x111] sm:$0xff]
        %v2156 = vld [vmem:[%s1853 + $0x121] sm:$0xff]
        %v2157 = vld [vmem:[%s1853 + $0x129] sm:$0xff]
        %v2158 = vld [vmem:[%s1853 + $0x139] sm:$0xff]
        %v2159 = vld [vmem:[%s1853 + $0x141] sm:$0xff]
        %v2160 = vld [vmem:[%s1853 + $0x151] sm:$0xff]
        %v2161 = vld [vmem:[%s1853 + $0x159] sm:$0xff]
        %v2162 = vld [vmem:[%s1853 + $0x169] sm:$0xff]
        %v2163 = vld [vmem:[%s1853 + $0x171] sm:$0xff]
        %s2164 = scalar_lea.vmem %s1, 28
        %v2165 = vld [vmem:[%s2164] sm:$0xf]
        %v2167 = vsel %vm310, %v2132, 0
        %v2170 = vsel %vm310, %v2133, 0
        %v2173 = vsel %vm310, %v2134, 0
        %v2176 = vsel %vm310, %v2135, 0
        %v2179 = vsel %vm310, %v2136, 0
        %v2182 = vsel %vm310, %v2137, 0
        %v2185 = vsel %vm310, %v2138, 0
        %v2188 = vsel %vm310, %v2139, 0
        %v2191 = vsel %vm310, %v2140, 0
        %v2194 = vsel %vm310, %v2141, 0
        %v2197 = vsel %vm310, %v2142, 0
        %v2200 = vsel %vm310, %v2143, 0
        %v2203 = vsel %vm310, %v2144, 0
        %v2206 = vsel %vm310, %v2145, 0
        %v2209 = vsel %vm310, %v2146, 0
        %v2212 = vsel %vm310, %v2147, 0
        %v2215 = vsel %vm310, %v2148, 0
        %v2218 = vsel %vm310, %v2149, 0
        %v2221 = vsel %vm310, %v2150, 0
        %v2224 = vsel %vm310, %v2151, 0
        %v2227 = vsel %vm310, %v2152, 0
        %v2230 = vsel %vm310, %v2153, 0
        %v2233 = vsel %vm310, %v2154, 0
        %v2236 = vsel %vm310, %v2155, 0
        %v2239 = vsel %vm310, %v2156, 0
        %v2242 = vsel %vm310, %v2157, 0
        %v2245 = vsel %vm310, %v2158, 0
        %v2248 = vsel %vm310, %v2159, 0
        %v2251 = vsel %vm310, %v2160, 0
        %v2254 = vsel %vm310, %v2161, 0
        %v2257 = vsel %vm310, %v2162, 0
        %v2260 = vsel %vm310, %v2163, 0
        %v2263 = vsel %vm407, %v2165, 0
        %2265 = vmatpush.msra.mxu0 0.0
        %2266 = vmatpush.msra.mxu0 0.0
        %2267 = vmatpush.msra.mxu0 0.0
        %2268 = vmatpush.msra.mxu0 0.0
        %2269 = vmatpush.msra.mxu0 0.0
        %2270 = vmatpush.msra.mxu0 0.0
        %2271 = vmatpush.msra.mxu0 0.0
        %2272 = vmatpush.msra.mxu0 0.0
        %2273 = vmatpush.msra.mxu0 0.0
        %2274 = vmatpush.msra.mxu0 0.0
        %2275 = vmatpush.msra.mxu0 0.0
        %2276 = vmatpush.msra.mxu0 0.0
        %2277 = vmatpush.msra.mxu0 0.0
        %2278 = vmatpush.msra.mxu0 0.0
        %2279 = vmatpush.msra.mxu0 0.0
        %2280 = vmatpush.msra.mxu0 %v2263
        %2281 = vmatmul.f32.gmra.mxu0 %v2167
        %v2282 = vpop.f32.mrf.mxu0
        %v2283 = vadd.f32 0.0, %v2282
        %2284 = vmatmul.f32.gmra.mxu0 %v2170
        %v2285 = vpop.f32.mrf.mxu0
        %v2286 = vadd.f32 0.0, %v2285
        %2287 = vmatmul.f32.gmra.mxu0 %v2173
        %v2288 = vpop.f32.mrf.mxu0
        %v2289 = vadd.f32 0.0, %v2288
        %2290 = vmatmul.f32.gmra.mxu0 %v2176
        %v2291 = vpop.f32.mrf.mxu0
        %v2292 = vadd.f32 0.0, %v2291
        %2293 = vmatmul.f32.gmra.mxu0 %v2179
        %v2294 = vpop.f32.mrf.mxu0
        %v2295 = vadd.f32 0.0, %v2294
        %2296 = vmatmul.f32.gmra.mxu0 %v2182
        %v2297 = vpop.f32.mrf.mxu0
        %v2298 = vadd.f32 0.0, %v2297
        %2299 = vmatmul.f32.gmra.mxu0 %v2185
        %v2300 = vpop.f32.mrf.mxu0
        %v2301 = vadd.f32 0.0, %v2300
        %2302 = vmatmul.f32.gmra.mxu0 %v2188
        %v2303 = vpop.f32.mrf.mxu0
        %v2304 = vadd.f32 0.0, %v2303
        %2305 = vmatmul.f32.gmra.mxu0 %v2191
        %v2306 = vpop.f32.mrf.mxu0
        %v2307 = vadd.f32 0.0, %v2306
        %2308 = vmatmul.f32.gmra.mxu0 %v2194
        %v2309 = vpop.f32.mrf.mxu0
        %v2310 = vadd.f32 0.0, %v2309
        %2311 = vmatmul.f32.gmra.mxu0 %v2197
        %v2312 = vpop.f32.mrf.mxu0
        %v2313 = vadd.f32 0.0, %v2312
        %2314 = vmatmul.f32.gmra.mxu0 %v2200
        %v2315 = vpop.f32.mrf.mxu0
        %v2316 = vadd.f32 0.0, %v2315
        %2317 = vmatmul.f32.gmra.mxu0 %v2203
        %v2318 = vpop.f32.mrf.mxu0
        %v2319 = vadd.f32 0.0, %v2318
        %2320 = vmatmul.f32.gmra.mxu0 %v2206
        %v2321 = vpop.f32.mrf.mxu0
        %v2322 = vadd.f32 0.0, %v2321
        %2323 = vmatmul.f32.gmra.mxu0 %v2209
        %v2324 = vpop.f32.mrf.mxu0
        %v2325 = vadd.f32 0.0, %v2324
        %2326 = vmatmul.f32.gmra.mxu0 %v2212
        %v2327 = vpop.f32.mrf.mxu0
        %v2328 = vadd.f32 0.0, %v2327
        %2329 = vmatmul.f32.gmra.mxu0 %v2215
        %v2330 = vpop.f32.mrf.mxu0
        %v2331 = vadd.f32 0.0, %v2330
        %2332 = vmatmul.f32.gmra.mxu0 %v2218
        %v2333 = vpop.f32.mrf.mxu0
        %v2334 = vadd.f32 0.0, %v2333
        %2335 = vmatmul.f32.gmra.mxu0 %v2221
        %v2336 = vpop.f32.mrf.mxu0
        %v2337 = vadd.f32 0.0, %v2336
        %2338 = vmatmul.f32.gmra.mxu0 %v2224
        %v2339 = vpop.f32.mrf.mxu0
        %v2340 = vadd.f32 0.0, %v2339
        %2341 = vmatmul.f32.gmra.mxu0 %v2227
        %v2342 = vpop.f32.mrf.mxu0
        %v2343 = vadd.f32 0.0, %v2342
        %2344 = vmatmul.f32.gmra.mxu0 %v2230
        %v2345 = vpop.f32.mrf.mxu0
        %v2346 = vadd.f32 0.0, %v2345
        %2347 = vmatmul.f32.gmra.mxu0 %v2233
        %v2348 = vpop.f32.mrf.mxu0
        %v2349 = vadd.f32 0.0, %v2348
        %2350 = vmatmul.f32.gmra.mxu0 %v2236
        %v2351 = vpop.f32.mrf.mxu0
        %v2352 = vadd.f32 0.0, %v2351
        %2353 = vmatmul.f32.gmra.mxu0 %v2239
        %v2354 = vpop.f32.mrf.mxu0
        %v2355 = vadd.f32 0.0, %v2354
        %2356 = vmatmul.f32.gmra.mxu0 %v2242
        %v2357 = vpop.f32.mrf.mxu0
        %v2358 = vadd.f32 0.0, %v2357
        %2359 = vmatmul.f32.gmra.mxu0 %v2245
        %v2360 = vpop.f32.mrf.mxu0
        %v2361 = vadd.f32 0.0, %v2360
        %2362 = vmatmul.f32.gmra.mxu0 %v2248
        %v2363 = vpop.f32.mrf.mxu0
        %v2364 = vadd.f32 0.0, %v2363
        %2365 = vmatmul.f32.gmra.mxu0 %v2251
        %v2366 = vpop.f32.mrf.mxu0
        %v2367 = vadd.f32 0.0, %v2366
        %2368 = vmatmul.f32.gmra.mxu0 %v2254
        %v2369 = vpop.f32.mrf.mxu0
        %v2370 = vadd.f32 0.0, %v2369
        %2371 = vmatmul.f32.gmra.mxu0 %v2257
        %v2372 = vpop.f32.mrf.mxu0
        %v2373 = vadd.f32 0.0, %v2372
        %2374 = vmatmul.f32.gmra.mxu0 %v2260
        %v2375 = vpop.f32.mrf.mxu0
        %v2376 = vadd.f32 0.0, %v2375
        %2377 = vdwg.mxu0
        %v2378 = vadd.f32 %v2100, %v2283
        %v2379 = vadd.f32 %v2101, %v2286
        %v2380 = vadd.f32 %v2102, %v2289
        %v2381 = vadd.f32 %v2103, %v2292
        %v2382 = vadd.f32 %v2104, %v2295
        %v2383 = vadd.f32 %v2105, %v2298
        %v2384 = vadd.f32 %v2106, %v2301
        %v2385 = vadd.f32 %v2107, %v2304
        %v2386 = vadd.f32 %v2108, %v2307
        %v2387 = vadd.f32 %v2109, %v2310
        %v2388 = vadd.f32 %v2110, %v2313
        %v2389 = vadd.f32 %v2111, %v2316
        %v2390 = vadd.f32 %v2112, %v2319
        %v2391 = vadd.f32 %v2113, %v2322
        %v2392 = vadd.f32 %v2114, %v2325
        %v2393 = vadd.f32 %v2115, %v2328
        %v2394 = vadd.f32 %v2116, %v2331
        %v2395 = vadd.f32 %v2117, %v2334
        %v2396 = vadd.f32 %v2118, %v2337
        %v2397 = vadd.f32 %v2119, %v2340
        %v2398 = vadd.f32 %v2120, %v2343
        %v2399 = vadd.f32 %v2121, %v2346
        %v2400 = vadd.f32 %v2122, %v2349
        %v2401 = vadd.f32 %v2123, %v2352
        %v2402 = vadd.f32 %v2124, %v2355
        %v2403 = vadd.f32 %v2125, %v2358
        %v2404 = vadd.f32 %v2126, %v2361
        %v2405 = vadd.f32 %v2127, %v2364
        %v2406 = vadd.f32 %v2128, %v2367
        %v2407 = vadd.f32 %v2129, %v2370
        %v2408 = vadd.f32 %v2130, %v2373
        %v2409 = vadd.f32 %v2131, %v2376
        %v2410 = vld [vmem:[%s1853 + $0x2] sm:$0xff]
        %v2411 = vld [vmem:[%s1853 + $0xa] sm:$0xff]
        %v2412 = vld [vmem:[%s1853 + $0x1a] sm:$0xff]
        %v2413 = vld [vmem:[%s1853 + $0x22] sm:$0xff]
        %v2414 = vld [vmem:[%s1853 + $0x32] sm:$0xff]
        %v2415 = vld [vmem:[%s1853 + $0x3a] sm:$0xff]
        %v2416 = vld [vmem:[%s1853 + $0x4a] sm:$0xff]
        %v2417 = vld [vmem:[%s1853 + $0x52] sm:$0xff]
        %v2418 = vld [vmem:[%s1853 + $0x62] sm:$0xff]
        %v2419 = vld [vmem:[%s1853 + $0x6a] sm:$0xff]
        %v2420 = vld [vmem:[%s1853 + $0x7a] sm:$0xff]
        %v2421 = vld [vmem:[%s1853 + $0x82] sm:$0xff]
        %v2422 = vld [vmem:[%s1853 + $0x92] sm:$0xff]
        %v2423 = vld [vmem:[%s1853 + $0x9a] sm:$0xff]
        %v2424 = vld [vmem:[%s1853 + $0xaa] sm:$0xff]
        %v2425 = vld [vmem:[%s1853 + $0xb2] sm:$0xff]
        %v2426 = vld [vmem:[%s1853 + $0xc2] sm:$0xff]
        %v2427 = vld [vmem:[%s1853 + $0xca] sm:$0xff]
        %v2428 = vld [vmem:[%s1853 + $0xda] sm:$0xff]
        %v2429 = vld [vmem:[%s1853 + $0xe2] sm:$0xff]
        %v2430 = vld [vmem:[%s1853 + $0xf2] sm:$0xff]
        %v2431 = vld [vmem:[%s1853 + $0xfa] sm:$0xff]
        %v2432 = vld [vmem:[%s1853 + $0x10a] sm:$0xff]
        %v2433 = vld [vmem:[%s1853 + $0x112] sm:$0xff]
        %v2434 = vld [vmem:[%s1853 + $0x122] sm:$0xff]
        %v2435 = vld [vmem:[%s1853 + $0x12a] sm:$0xff]
        %v2436 = vld [vmem:[%s1853 + $0x13a] sm:$0xff]
        %v2437 = vld [vmem:[%s1853 + $0x142] sm:$0xff]
        %v2438 = vld [vmem:[%s1853 + $0x152] sm:$0xff]
        %v2439 = vld [vmem:[%s1853 + $0x15a] sm:$0xff]
        %v2440 = vld [vmem:[%s1853 + $0x16a] sm:$0xff]
        %v2441 = vld [vmem:[%s1853 + $0x172] sm:$0xff]
        %s2442 = scalar_lea.vmem %s1, 32
        %v2443 = vld [vmem:[%s2442] sm:$0xf]
        %v2445 = vsel %vm310, %v2410, 0
        %v2448 = vsel %vm310, %v2411, 0
        %v2451 = vsel %vm310, %v2412, 0
        %v2454 = vsel %vm310, %v2413, 0
        %v2457 = vsel %vm310, %v2414, 0
        %v2460 = vsel %vm310, %v2415, 0
        %v2463 = vsel %vm310, %v2416, 0
        %v2466 = vsel %vm310, %v2417, 0
        %v2469 = vsel %vm310, %v2418, 0
        %v2472 = vsel %vm310, %v2419, 0
        %v2475 = vsel %vm310, %v2420, 0
        %v2478 = vsel %vm310, %v2421, 0
        %v2481 = vsel %vm310, %v2422, 0
        %v2484 = vsel %vm310, %v2423, 0
        %v2487 = vsel %vm310, %v2424, 0
        %v2490 = vsel %vm310, %v2425, 0
        %v2493 = vsel %vm310, %v2426, 0
        %v2496 = vsel %vm310, %v2427, 0
        %v2499 = vsel %vm310, %v2428, 0
        %v2502 = vsel %vm310, %v2429, 0
        %v2505 = vsel %vm310, %v2430, 0
        %v2508 = vsel %vm310, %v2431, 0
        %v2511 = vsel %vm310, %v2432, 0
        %v2514 = vsel %vm310, %v2433, 0
        %v2517 = vsel %vm310, %v2434, 0
        %v2520 = vsel %vm310, %v2435, 0
        %v2523 = vsel %vm310, %v2436, 0
        %v2526 = vsel %vm310, %v2437, 0
        %v2529 = vsel %vm310, %v2438, 0
        %v2532 = vsel %vm310, %v2439, 0
        %v2535 = vsel %vm310, %v2440, 0
        %v2538 = vsel %vm310, %v2441, 0
        %v2541 = vsel %vm407, %v2443, 0
        %2543 = vmatpush.msra.mxu0 0.0
        %2544 = vmatpush.msra.mxu0 0.0
        %2545 = vmatpush.msra.mxu0 0.0
        %2546 = vmatpush.msra.mxu0 0.0
        %2547 = vmatpush.msra.mxu0 0.0
        %2548 = vmatpush.msra.mxu0 0.0
        %2549 = vmatpush.msra.mxu0 0.0
        %2550 = vmatpush.msra.mxu0 0.0
        %2551 = vmatpush.msra.mxu0 0.0
        %2552 = vmatpush.msra.mxu0 0.0
        %2553 = vmatpush.msra.mxu0 0.0
        %2554 = vmatpush.msra.mxu0 0.0
        %2555 = vmatpush.msra.mxu0 0.0
        %2556 = vmatpush.msra.mxu0 0.0
        %2557 = vmatpush.msra.mxu0 0.0
        %2558 = vmatpush.msra.mxu0 %v2541
        %2559 = vmatmul.f32.gmra.mxu0 %v2445
        %v2560 = vpop.f32.mrf.mxu0
        %v2561 = vadd.f32 0.0, %v2560
        %2562 = vmatmul.f32.gmra.mxu0 %v2448
        %v2563 = vpop.f32.mrf.mxu0
        %v2564 = vadd.f32 0.0, %v2563
        %2565 = vmatmul.f32.gmra.mxu0 %v2451
        %v2566 = vpop.f32.mrf.mxu0
        %v2567 = vadd.f32 0.0, %v2566
        %2568 = vmatmul.f32.gmra.mxu0 %v2454
        %v2569 = vpop.f32.mrf.mxu0
        %v2570 = vadd.f32 0.0, %v2569
        %2571 = vmatmul.f32.gmra.mxu0 %v2457
        %v2572 = vpop.f32.mrf.mxu0
        %v2573 = vadd.f32 0.0, %v2572
        %2574 = vmatmul.f32.gmra.mxu0 %v2460
        %v2575 = vpop.f32.mrf.mxu0
        %v2576 = vadd.f32 0.0, %v2575
        %2577 = vmatmul.f32.gmra.mxu0 %v2463
        %v2578 = vpop.f32.mrf.mxu0
        %v2579 = vadd.f32 0.0, %v2578
        %2580 = vmatmul.f32.gmra.mxu0 %v2466
        %v2581 = vpop.f32.mrf.mxu0
        %v2582 = vadd.f32 0.0, %v2581
        %2583 = vmatmul.f32.gmra.mxu0 %v2469
        %v2584 = vpop.f32.mrf.mxu0
        %v2585 = vadd.f32 0.0, %v2584
        %2586 = vmatmul.f32.gmra.mxu0 %v2472
        %v2587 = vpop.f32.mrf.mxu0
        %v2588 = vadd.f32 0.0, %v2587
        %2589 = vmatmul.f32.gmra.mxu0 %v2475
        %v2590 = vpop.f32.mrf.mxu0
        %v2591 = vadd.f32 0.0, %v2590
        %2592 = vmatmul.f32.gmra.mxu0 %v2478
        %v2593 = vpop.f32.mrf.mxu0
        %v2594 = vadd.f32 0.0, %v2593
        %2595 = vmatmul.f32.gmra.mxu0 %v2481
        %v2596 = vpop.f32.mrf.mxu0
        %v2597 = vadd.f32 0.0, %v2596
        %2598 = vmatmul.f32.gmra.mxu0 %v2484
        %v2599 = vpop.f32.mrf.mxu0
        %v2600 = vadd.f32 0.0, %v2599
        %2601 = vmatmul.f32.gmra.mxu0 %v2487
        %v2602 = vpop.f32.mrf.mxu0
        %v2603 = vadd.f32 0.0, %v2602
        %2604 = vmatmul.f32.gmra.mxu0 %v2490
        %v2605 = vpop.f32.mrf.mxu0
        %v2606 = vadd.f32 0.0, %v2605
        %2607 = vmatmul.f32.gmra.mxu0 %v2493
        %v2608 = vpop.f32.mrf.mxu0
        %v2609 = vadd.f32 0.0, %v2608
        %2610 = vmatmul.f32.gmra.mxu0 %v2496
        %v2611 = vpop.f32.mrf.mxu0
        %v2612 = vadd.f32 0.0, %v2611
        %2613 = vmatmul.f32.gmra.mxu0 %v2499
        %v2614 = vpop.f32.mrf.mxu0
        %v2615 = vadd.f32 0.0, %v2614
        %2616 = vmatmul.f32.gmra.mxu0 %v2502
        %v2617 = vpop.f32.mrf.mxu0
        %v2618 = vadd.f32 0.0, %v2617
        %2619 = vmatmul.f32.gmra.mxu0 %v2505
        %v2620 = vpop.f32.mrf.mxu0
        %v2621 = vadd.f32 0.0, %v2620
        %2622 = vmatmul.f32.gmra.mxu0 %v2508
        %v2623 = vpop.f32.mrf.mxu0
        %v2624 = vadd.f32 0.0, %v2623
        %2625 = vmatmul.f32.gmra.mxu0 %v2511
        %v2626 = vpop.f32.mrf.mxu0
        %v2627 = vadd.f32 0.0, %v2626
        %2628 = vmatmul.f32.gmra.mxu0 %v2514
        %v2629 = vpop.f32.mrf.mxu0
        %v2630 = vadd.f32 0.0, %v2629
        %2631 = vmatmul.f32.gmra.mxu0 %v2517
        %v2632 = vpop.f32.mrf.mxu0
        %v2633 = vadd.f32 0.0, %v2632
        %2634 = vmatmul.f32.gmra.mxu0 %v2520
        %v2635 = vpop.f32.mrf.mxu0
        %v2636 = vadd.f32 0.0, %v2635
        %2637 = vmatmul.f32.gmra.mxu0 %v2523
        %v2638 = vpop.f32.mrf.mxu0
        %v2639 = vadd.f32 0.0, %v2638
        %2640 = vmatmul.f32.gmra.mxu0 %v2526
        %v2641 = vpop.f32.mrf.mxu0
        %v2642 = vadd.f32 0.0, %v2641
        %2643 = vmatmul.f32.gmra.mxu0 %v2529
        %v2644 = vpop.f32.mrf.mxu0
        %v2645 = vadd.f32 0.0, %v2644
        %2646 = vmatmul.f32.gmra.mxu0 %v2532
        %v2647 = vpop.f32.mrf.mxu0
        %v2648 = vadd.f32 0.0, %v2647
        %2649 = vmatmul.f32.gmra.mxu0 %v2535
        %v2650 = vpop.f32.mrf.mxu0
        %v2651 = vadd.f32 0.0, %v2650
        %2652 = vmatmul.f32.gmra.mxu0 %v2538
        %v2653 = vpop.f32.mrf.mxu0
        %v2654 = vadd.f32 0.0, %v2653
        %2655 = vdwg.mxu0
        %v2656 = vadd.f32 %v2378, %v2561
        %v2657 = vadd.f32 %v2379, %v2564
        %v2658 = vadd.f32 %v2380, %v2567
        %v2659 = vadd.f32 %v2381, %v2570
        %v2660 = vadd.f32 %v2382, %v2573
        %v2661 = vadd.f32 %v2383, %v2576
        %v2662 = vadd.f32 %v2384, %v2579
        %v2663 = vadd.f32 %v2385, %v2582
        %v2664 = vadd.f32 %v2386, %v2585
        %v2665 = vadd.f32 %v2387, %v2588
        %v2666 = vadd.f32 %v2388, %v2591
        %v2667 = vadd.f32 %v2389, %v2594
        %v2668 = vadd.f32 %v2390, %v2597
        %v2669 = vadd.f32 %v2391, %v2600
        %v2670 = vadd.f32 %v2392, %v2603
        %v2671 = vadd.f32 %v2393, %v2606
        %v2672 = vadd.f32 %v2394, %v2609
        %v2673 = vadd.f32 %v2395, %v2612
        %v2674 = vadd.f32 %v2396, %v2615
        %v2675 = vadd.f32 %v2397, %v2618
        %v2676 = vadd.f32 %v2398, %v2621
        %v2677 = vadd.f32 %v2399, %v2624
        %v2678 = vadd.f32 %v2400, %v2627
        %v2679 = vadd.f32 %v2401, %v2630
        %v2680 = vadd.f32 %v2402, %v2633
        %v2681 = vadd.f32 %v2403, %v2636
        %v2682 = vadd.f32 %v2404, %v2639
        %v2683 = vadd.f32 %v2405, %v2642
        %v2684 = vadd.f32 %v2406, %v2645
        %v2685 = vadd.f32 %v2407, %v2648
        %v2686 = vadd.f32 %v2408, %v2651
        %v2687 = vadd.f32 %v2409, %v2654
        %vm2688 = vcmask 64512
        %2689 = vst.msk [vmem:[%s238] sm:$0xff] %vm2688, %v2656
        %2690 = vst.msk [vmem:[%s238 + $0x8] sm:$0xff] %vm2688, %v2657
        %2691 = vst.msk [vmem:[%s238 + $0x10] sm:$0xff] %vm2688, %v2658
        %2692 = vst.msk [vmem:[%s238 + $0x18] sm:$0xff] %vm2688, %v2659
        %2693 = vst.msk [vmem:[%s238 + $0x20] sm:$0xff] %vm2688, %v2660
        %2694 = vst.msk [vmem:[%s238 + $0x28] sm:$0xff] %vm2688, %v2661
        %2695 = vst.msk [vmem:[%s238 + $0x30] sm:$0xff] %vm2688, %v2662
        %2696 = vst.msk [vmem:[%s238 + $0x38] sm:$0xff] %vm2688, %v2663
        %2697 = vst.msk [vmem:[%s238 + $0x40] sm:$0xff] %vm2688, %v2664
        %2698 = vst.msk [vmem:[%s238 + $0x48] sm:$0xff] %vm2688, %v2665
        %2699 = vst.msk [vmem:[%s238 + $0x50] sm:$0xff] %vm2688, %v2666
        %2700 = vst.msk [vmem:[%s238 + $0x58] sm:$0xff] %vm2688, %v2667
        %2701 = vst.msk [vmem:[%s238 + $0x60] sm:$0xff] %vm2688, %v2668
        %2702 = vst.msk [vmem:[%s238 + $0x68] sm:$0xff] %vm2688, %v2669
        %2703 = vst.msk [vmem:[%s238 + $0x70] sm:$0xff] %vm2688, %v2670
        %2704 = vst.msk [vmem:[%s238 + $0x78] sm:$0xff] %vm2688, %v2671
        %2705 = vst.msk [vmem:[%s238 + $0x80] sm:$0xff] %vm2688, %v2672
        %2706 = vst.msk [vmem:[%s238 + $0x88] sm:$0xff] %vm2688, %v2673
        %2707 = vst.msk [vmem:[%s238 + $0x90] sm:$0xff] %vm2688, %v2674
        %2708 = vst.msk [vmem:[%s238 + $0x98] sm:$0xff] %vm2688, %v2675
        %2709 = vst.msk [vmem:[%s238 + $0xa0] sm:$0xff] %vm2688, %v2676
        %2710 = vst.msk [vmem:[%s238 + $0xa8] sm:$0xff] %vm2688, %v2677
        %2711 = vst.msk [vmem:[%s238 + $0xb0] sm:$0xff] %vm2688, %v2678
        %2712 = vst.msk [vmem:[%s238 + $0xb8] sm:$0xff] %vm2688, %v2679
        %2713 = vst.msk [vmem:[%s238 + $0xc0] sm:$0xff] %vm2688, %v2680
        %2714 = vst.msk [vmem:[%s238 + $0xc8] sm:$0xff] %vm2688, %v2681
        %2715 = vst.msk [vmem:[%s238 + $0xd0] sm:$0xff] %vm2688, %v2682
        %2716 = vst.msk [vmem:[%s238 + $0xd8] sm:$0xff] %vm2688, %v2683
        %2717 = vst.msk [vmem:[%s238 + $0xe0] sm:$0xff] %vm2688, %v2684
        %2718 = vst.msk [vmem:[%s238 + $0xe8] sm:$0xff] %vm2688, %v2685
        %2719 = vst.msk [vmem:[%s238 + $0xf0] sm:$0xff] %vm2688, %v2686
        %2720 = vst.msk [vmem:[%s238 + $0xf8] sm:$0xff] %vm2688, %v2687
        %v2721 = vsel %vm2688, %v2656, 0.0
        %v2722 = vsel %vm2688, %v2657, 0.0
        %v2723 = vadd.f32 %v2721, %v2722
        %v2724 = vsel %vm2688, %v2658, 0.0
        %v2725 = vadd.f32 %v2723, %v2724
        %v2726 = vsel %vm2688, %v2659, 0.0
        %v2727 = vadd.f32 %v2725, %v2726
        %v2728 = vsel %vm2688, %v2660, 0.0
        %v2729 = vadd.f32 %v2727, %v2728
        %v2730 = vsel %vm2688, %v2661, 0.0
        %v2731 = vadd.f32 %v2729, %v2730
        %v2732 = vsel %vm2688, %v2662, 0.0
        %v2733 = vadd.f32 %v2731, %v2732
        %v2734 = vsel %vm2688, %v2663, 0.0
        %v2735 = vadd.f32 %v2733, %v2734
        %v2736 = vsel %vm2688, %v2664, 0.0
        %v2737 = vadd.f32 %v2735, %v2736
        %v2738 = vsel %vm2688, %v2665, 0.0
        %v2739 = vadd.f32 %v2737, %v2738
        %v2740 = vsel %vm2688, %v2666, 0.0
        %v2741 = vadd.f32 %v2739, %v2740
        %v2742 = vsel %vm2688, %v2667, 0.0
        %v2743 = vadd.f32 %v2741, %v2742
        %v2744 = vsel %vm2688, %v2668, 0.0
        %v2745 = vadd.f32 %v2743, %v2744
        %v2746 = vsel %vm2688, %v2669, 0.0
        %v2747 = vadd.f32 %v2745, %v2746
        %v2748 = vsel %vm2688, %v2670, 0.0
        %v2749 = vadd.f32 %v2747, %v2748
        %v2750 = vsel %vm2688, %v2671, 0.0
        %v2751 = vadd.f32 %v2749, %v2750
        %v2752 = vsel %vm2688, %v2672, 0.0
        %v2753 = vadd.f32 %v2751, %v2752
        %v2754 = vsel %vm2688, %v2673, 0.0
        %v2755 = vadd.f32 %v2753, %v2754
        %v2756 = vsel %vm2688, %v2674, 0.0
        %v2757 = vadd.f32 %v2755, %v2756
        %v2758 = vsel %vm2688, %v2675, 0.0
        %v2759 = vadd.f32 %v2757, %v2758
        %v2760 = vsel %vm2688, %v2676, 0.0
        %v2761 = vadd.f32 %v2759, %v2760
        %v2762 = vsel %vm2688, %v2677, 0.0
        %v2763 = vadd.f32 %v2761, %v2762
        %v2764 = vsel %vm2688, %v2678, 0.0
        %v2765 = vadd.f32 %v2763, %v2764
        %v2766 = vsel %vm2688, %v2679, 0.0
        %v2767 = vadd.f32 %v2765, %v2766
        %v2768 = vsel %vm2688, %v2680, 0.0
        %v2769 = vadd.f32 %v2767, %v2768
        %v2770 = vsel %vm2688, %v2681, 0.0
        %v2771 = vadd.f32 %v2769, %v2770
        %v2772 = vsel %vm2688, %v2682, 0.0
        %v2773 = vadd.f32 %v2771, %v2772
        %v2774 = vsel %vm2688, %v2683, 0.0
        %v2775 = vadd.f32 %v2773, %v2774
        %v2776 = vsel %vm2688, %v2684, 0.0
        %v2777 = vadd.f32 %v2775, %v2776
        %v2778 = vsel %vm2688, %v2685, 0.0
        %v2779 = vadd.f32 %v2777, %v2778
        %v2780 = vsel %vm2688, %v2686, 0.0
        %v2781 = vadd.f32 %v2779, %v2780
        %v2782 = vsel %vm2688, %v2687, 0.0
        %v2783 = vadd.f32 %v2781, %v2782
        %v2784 = vrot.slane %v2783, 4
        %v2785 = vadd.f32 %v2783, %v2784
        %v2786 = vrot.slane %v2785, 2
        %v2787 = vadd.f32 %v2785, %v2786
        %v2788 = vrot.slane %v2787, 1
        %v2789 = vadd.f32 %v2787, %v2788
        %v2790 = vmul.f32 %v2656, %v2656
        %v2791 = vmul.f32 %v2657, %v2657
        %v2792 = vmul.f32 %v2658, %v2658
        %v2793 = vmul.f32 %v2659, %v2659
        %v2794 = vmul.f32 %v2660, %v2660
        %v2795 = vmul.f32 %v2661, %v2661
        %v2796 = vmul.f32 %v2662, %v2662
        %v2797 = vmul.f32 %v2663, %v2663
        %v2798 = vmul.f32 %v2664, %v2664
        %v2799 = vmul.f32 %v2665, %v2665
        %v2800 = vmul.f32 %v2666, %v2666
        %v2801 = vmul.f32 %v2667, %v2667
        %v2802 = vmul.f32 %v2668, %v2668
        %v2803 = vmul.f32 %v2669, %v2669
        %v2804 = vmul.f32 %v2670, %v2670
        %v2805 = vmul.f32 %v2671, %v2671
        %v2806 = vmul.f32 %v2672, %v2672
        %v2807 = vmul.f32 %v2673, %v2673
        %v2808 = vmul.f32 %v2674, %v2674
        %v2809 = vmul.f32 %v2675, %v2675
        %v2810 = vmul.f32 %v2676, %v2676
        %v2811 = vmul.f32 %v2677, %v2677
        %v2812 = vmul.f32 %v2678, %v2678
        %v2813 = vmul.f32 %v2679, %v2679
        %v2814 = vmul.f32 %v2680, %v2680
        %v2815 = vmul.f32 %v2681, %v2681
        %v2816 = vmul.f32 %v2682, %v2682
        %v2817 = vmul.f32 %v2683, %v2683
        %v2818 = vmul.f32 %v2684, %v2684
        %v2819 = vmul.f32 %v2685, %v2685
        %v2820 = vmul.f32 %v2686, %v2686
        %v2821 = vmul.f32 %v2687, %v2687
        %v2822 = vsel %vm2688, %v2790, 0.0
        %v2823 = vsel %vm2688, %v2791, 0.0
        %v2824 = vadd.f32 %v2822, %v2823
        %v2825 = vsel %vm2688, %v2792, 0.0
        %v2826 = vadd.f32 %v2824, %v2825
        %v2827 = vsel %vm2688, %v2793, 0.0
        %v2828 = vadd.f32 %v2826, %v2827
        %v2829 = vsel %vm2688, %v2794, 0.0
        %v2830 = vadd.f32 %v2828, %v2829
        %v2831 = vsel %vm2688, %v2795, 0.0
        %v2832 = vadd.f32 %v2830, %v2831
        %v2833 = vsel %vm2688, %v2796, 0.0
        %v2834 = vadd.f32 %v2832, %v2833
        %v2835 = vsel %vm2688, %v2797, 0.0
        %v2836 = vadd.f32 %v2834, %v2835
        %v2837 = vsel %vm2688, %v2798, 0.0
        %v2838 = vadd.f32 %v2836, %v2837
        %v2839 = vsel %vm2688, %v2799, 0.0
        %v2840 = vadd.f32 %v2838, %v2839
        %v2841 = vsel %vm2688, %v2800, 0.0
        %v2842 = vadd.f32 %v2840, %v2841
        %v2843 = vsel %vm2688, %v2801, 0.0
        %v2844 = vadd.f32 %v2842, %v2843
        %v2845 = vsel %vm2688, %v2802, 0.0
        %v2846 = vadd.f32 %v2844, %v2845
        %v2847 = vsel %vm2688, %v2803, 0.0
        %v2848 = vadd.f32 %v2846, %v2847
        %v2849 = vsel %vm2688, %v2804, 0.0
        %v2850 = vadd.f32 %v2848, %v2849
        %v2851 = vsel %vm2688, %v2805, 0.0
        %v2852 = vadd.f32 %v2850, %v2851
        %v2853 = vsel %vm2688, %v2806, 0.0
        %v2854 = vadd.f32 %v2852, %v2853
        %v2855 = vsel %vm2688, %v2807, 0.0
        %v2856 = vadd.f32 %v2854, %v2855
        %v2857 = vsel %vm2688, %v2808, 0.0
        %v2858 = vadd.f32 %v2856, %v2857
        %v2859 = vsel %vm2688, %v2809, 0.0
        %v2860 = vadd.f32 %v2858, %v2859
        %v2861 = vsel %vm2688, %v2810, 0.0
        %v2862 = vadd.f32 %v2860, %v2861
        %v2863 = vsel %vm2688, %v2811, 0.0
        %v2864 = vadd.f32 %v2862, %v2863
        %v2865 = vsel %vm2688, %v2812, 0.0
        %v2866 = vadd.f32 %v2864, %v2865
        %v2867 = vsel %vm2688, %v2813, 0.0
        %v2868 = vadd.f32 %v2866, %v2867
        %v2869 = vsel %vm2688, %v2814, 0.0
        %v2870 = vadd.f32 %v2868, %v2869
        %v2871 = vsel %vm2688, %v2815, 0.0
        %v2872 = vadd.f32 %v2870, %v2871
        %v2873 = vsel %vm2688, %v2816, 0.0
        %v2874 = vadd.f32 %v2872, %v2873
        %v2875 = vsel %vm2688, %v2817, 0.0
        %v2876 = vadd.f32 %v2874, %v2875
        %v2877 = vsel %vm2688, %v2818, 0.0
        %v2878 = vadd.f32 %v2876, %v2877
        %v2879 = vsel %vm2688, %v2819, 0.0
        %v2880 = vadd.f32 %v2878, %v2879
        %v2881 = vsel %vm2688, %v2820, 0.0
        %v2882 = vadd.f32 %v2880, %v2881
        %v2883 = vsel %vm2688, %v2821, 0.0
        %v2884 = vadd.f32 %v2882, %v2883
        %v2885 = vrot.slane %v2884, 4
        %v2886 = vadd.f32 %v2884, %v2885
        %v2887 = vrot.slane %v2886, 2
        %v2888 = vadd.f32 %v2886, %v2887
        %v2889 = vrot.slane %v2888, 1
        %v2890 = vadd.f32 %v2888, %v2889
        %p2891 = scmp.eq.s32.totalorder %s27, 0
        // Predicated region
        $region29: #{tpu_custom_call.1} parent=27 // pred_check
          %p2892 = pneg %p2891
        $region30: #{tpu_custom_call.1} parent=27 // pred_check_branch
          %2894 = sbr.rel (%p2892) target = $region32
        $region31: #{tpu_custom_call.1} parent=27 // pred_region
          %vm2895 = vcmask 57344
          %2896 = vst.msk [vmem:[%s218] sm:$0x1] %vm2895, %v2789
          %2897 = vst.msk [vmem:[%s224] sm:$0x1] %vm2895, %v2890
        $region32: #{tpu_custom_call.1} parent=27 // pred_fallthru
          _
        %p2898 = scmp.ne.s32.totalorder %s27, 0
        // Predicated region
        $region33: #{tpu_custom_call.1} parent=27 // pred_check
          %p2899 = pneg %p2898
        $region34: #{tpu_custom_call.1} parent=27 // pred_check_branch
          %2901 = sbr.rel (%p2899) target = $region36
        $region35: #{tpu_custom_call.1} parent=27 // pred_region
          %v2902 = vld [vmem:[%s218] sm:$0x1]
          %v2903 = vadd.f32 %v2902, %v2789
          %vm2904 = vcmask 57344
          %2905 = vst.msk [vmem:[%s218] sm:$0x1] %vm2904, %v2903
          %v2906 = vld [vmem:[%s224] sm:$0x1]
          %v2907 = vadd.f32 %v2906, %v2890
          %2908 = vst.msk [vmem:[%s224] sm:$0x1] %vm2904, %v2907
        $region36: #{tpu_custom_call.1} parent=27 // pred_fallthru
          _
        %s2909 = smul.u32 32, %s27
        %p2910 = scmp.lt.s32.totalorder %s26, 1
        %s2911 = scalar_select %p2910, %s26, 1
        %p2912 = scmp.lt.s32.totalorder %s2909, 31
        %s2913 = scalar_select %p2912, %s2909, 31
        %s2914 = smul.addr %s2911, 32
        %s2915 = sadd.s32 %s2913, %s2914
        %s2916 = smul.addr %s2915, 8
        %s2917 = scalar_lea.vmem %s2, %s2916
        %s2918 = sand.u32 %s117, 1
        %s2919 = scalar_lea.sflag [#allocation3], %s2918
        %s2920 = sand.u32 %s117, 1
        %s2921 = scalar_lea.vmem [#allocation2], %s2920
        %s2922 = sand.u32 %s143, 1
        %s2923 = scalar_lea.sflag [#allocation5], %s2922
        %s2924 = sand.u32 %s143, 1
        %s2925 = scalar_lea.vmem [#allocation4], %s2924
        // Predicated region
        $region37: #{tpu_custom_call.1} parent=27 // pred_check
          %p2926 = pneg %p101
        $region38: #{tpu_custom_call.1} parent=27 // pred_check_branch
          %2928 = sbr.rel (%p2926) target = $region40
        $region39: #{tpu_custom_call.1} parent=27 // pred_region
          %s2929 = smul.u32 32, %s27
        $region40: #{tpu_custom_call.1} parent=27 // pred_fallthru
          _
        // Predicated region
        $region41: #{tpu_custom_call.1} parent=27 // pred_check
          %p2930 = pneg %p127
        $region42: #{tpu_custom_call.1} parent=27 // pred_check_branch
          %2932 = sbr.rel (%p2930) target = $region44
        $region43: #{tpu_custom_call.1} parent=27 // pred_region
          %2934 = vsyncadd %s2919, 0
          %s2935 = scalar_lea.hbm %s3, %s26
          %s2937 = sshll.u32 %s2921, 4
          %s2938 = int_to_ptr.vmem [resolvable:$true] %s2937
          %s2939 = sshll.u32 %s2935, 4
          %s2940 = int_to_ptr.hbm [resolvable:$true] %s2939
          %2942 = dma.vmem_to_hbm [thread:$0]  %s2938, 16, %s2940, %s2919
        $region44: #{tpu_custom_call.1} parent=27 // pred_fallthru
          _
        // Predicated region
        $region45: #{tpu_custom_call.1} parent=27 // pred_check
          %p2943 = pneg %p153
        $region46: #{tpu_custom_call.1} parent=27 // pred_check_branch
          %2945 = sbr.rel (%p2943) target = $region48
        $region47: #{tpu_custom_call.1} parent=27 // pred_region
          %2947 = vsyncadd %s2923, 0
          %s2948 = scalar_lea.hbm %s4, %s26
          %s2950 = sshll.u32 %s2925, 4
          %s2951 = int_to_ptr.vmem [resolvable:$true] %s2950
          %s2952 = sshll.u32 %s2948, 4
          %s2953 = int_to_ptr.hbm [resolvable:$true] %s2952
          %2955 = dma.vmem_to_hbm [thread:$0]  %s2951, 16, %s2953, %s2923
        $region48: #{tpu_custom_call.1} parent=27 // pred_fallthru
          _
      $region28: #{tpu_custom_call.1} parent=5 // pred_fallthru
        _
      %p2956 = scmp.le.s32.totalorder 2, %s17
      // Predicated region
      $region49: #{tpu_custom_call.1} parent=5 // pred_check
        %p2957 = pneg %p2956
      $region50: #{tpu_custom_call.1} parent=5 // pred_check_branch
        %2959 = sbr.rel (%p2957) target = $region52
      $region51: #{tpu_custom_call.1} parent=5 // pred_region
        %s2960 = ssub.s32 %s17, 2
        // Predicated region
        $region53: #{tpu_custom_call.1} parent=51 // pred_check
          %p2961 = pneg %p107
        $region54: #{tpu_custom_call.1} parent=51 // pred_check_branch
          %2963 = sbr.rel (%p2961) target = $region56
        $region55: #{tpu_custom_call.1} parent=51 // pred_region
          %s2964 = smul.u32 32, %s29
          %p2965 = scmp.lt.s32.totalorder %s28, 1
          %s2966 = scalar_select %p2965, %s28, 1
          %p2967 = scmp.lt.s32.totalorder %s2964, 31
          %s2968 = scalar_select %p2967, %s2964, 31
          %s2969 = smul.addr %s2966, 32
          %s2970 = sadd.s32 %s2968, %s2969
          %s2971 = smul.addr %s2970, 8
          %s2972 = scalar_lea.vmem %s2, %s2971
        $region56: #{tpu_custom_call.1} parent=51 // pred_fallthru
          _
        // Predicated region
        $region57: #{tpu_custom_call.1} parent=51 // pred_check
          %p2973 = pneg %p133
        $region58: #{tpu_custom_call.1} parent=51 // pred_check_branch
          %2975 = sbr.rel (%p2973) target = $region60
        $region59: #{tpu_custom_call.1} parent=51 // pred_region
          %s2976 = sand.u32 %s118, 1
          %s2977 = scalar_lea.sflag [#allocation3], %s2976
          %s2978 = sand.u32 %s118, 1
          %s2979 = scalar_lea.vmem [#allocation2], %s2978
          %2981 = dma.done %s2977, 16
        $region60: #{tpu_custom_call.1} parent=51 // pred_fallthru
          _
        // Predicated region
        $region61: #{tpu_custom_call.1} parent=51 // pred_check
          %p2982 = pneg %p159
        $region62: #{tpu_custom_call.1} parent=51 // pred_check_branch
          %2984 = sbr.rel (%p2982) target = $region64
        $region63: #{tpu_custom_call.1} parent=51 // pred_region
          %s2985 = sand.u32 %s144, 1
          %s2986 = scalar_lea.sflag [#allocation5], %s2985
          %s2987 = sand.u32 %s144, 1
          %s2988 = scalar_lea.vmem [#allocation4], %s2987
          %2990 = dma.done %s2986, 16
        $region64: #{tpu_custom_call.1} parent=51 // pred_fallthru
          _
      $region52: #{tpu_custom_call.1} parent=5 // pred_fallthru
        _
    $region6: #{tpu_custom_call.1} parent=1 // loop_footer
      %s21 = sadd.s32 1, %s17
    $region7: #{tpu_custom_call.1} parent=1 // loop_footer_branch
      %16 = sbr.rel target = $region3
    $region8: #{tpu_custom_call.1} parent=1 // loop_exit
      _
    %2991 = vsyncpa [#allocation3], 1
    %s2992 = scalar_lea.sflag [#allocation3], 1
    %2993 = vsyncpa %s2992, 1
    %2994 = vsyncpa [#allocation5], 1
    %s2995 = scalar_lea.sflag [#allocation5], 1
    %2996 = vsyncpa %s2995, 1

</llo_original>
